<compile_context>
chip_gen: v7x
topology: tpu7x:2x2x1
jax: 0.10.0
libtpu: 0.0.40
codegen_flags: <defaults>
</compile_context>

<pallas_src>
import jax
import jax.numpy as jnp
from jax.experimental import pallas as pl
from jax.experimental.pallas import tpu as pltpu

LANE = 128                   # vreg lane width
SUB = 8                      # vreg sublane count
TR_MAX = 8192                # rows per tile: 8192*128*4B = 4 MiB per f32 block
SMALL_N = 64 * 1024          # below this, plain XLA reduce beats kernel launch
_MiB = 1024 * 1024


def _cdiv(a, b):
    return -(-a // b)


def _round_up(a, m):
    return _cdiv(a, m) * m


def _tpu_info():
    try:
        return pltpu.get_tpu_info()
    except Exception:
        return None


def _num_tensorcores_per_chip():
    info = _tpu_info()
    if info is None:
        return 1
    for attr in ("num_cores", "num_tensorcores", "tensorcore_count",
                 "cores_per_chip", "num_cores_per_chip"):
        v = getattr(info, attr, None)
        if isinstance(v, int) and v > 0:
            return min(v, 2)
    return 1


def _vmem_limit_bytes():
    cap = 128 * _MiB
    info = _tpu_info()
    if info is not None:
        v = getattr(info, "vmem_capacity_bytes", None)
        if isinstance(v, int) and v > 0:
            cap = v
    # 48 MiB comfortably holds 2 inputs x 2 pipeline buffers x 4 MiB blocks
    # plus f32 temporaries, and stays under v7x's 64 MiB physical VMEM.
    return max(32 * _MiB, min(48 * _MiB, (cap * 3) // 4))


def _make_mse_kernel(tr, rows, tiles_per_split, last_tile, ragged):
    def kernel(x_ref, t_ref, out_ref):
        s = pl.program_id(0)          # megacore split axis ("parallel")
        i = pl.program_id(1)          # reduction axis within the split

        @pl.when(i == 0)
        def _init():
            out_ref[...] = jnp.zeros_like(out_ref)

        xv = x_ref[...].astype(jnp.float32)
        tv = t_ref[...].astype(jnp.float32)
        d = xv - tv
        sq = d * d

        def _accumulate(vals):
            # Pure-VPU accumulate into the resident (8, 128) output block.
            out_ref[...] += vals.reshape(tr // SUB, SUB, LANE).sum(axis=0)

        if not ragged:
            _accumulate(sq)
        else:
            tile_idx = s * tiles_per_split + i

            @pl.when(tile_idx != last_tile)
            def _full():
                _accumulate(sq)

            @pl.when(tile_idx == last_tile)
            def _partial():
                # Only the last tile can overhang the array: mask the
                # undefined padded rows.  (tr, 1) iota, broadcast over lanes.
                row0 = last_tile * tr
                row_ids = row0 + jax.lax.broadcasted_iota(jnp.int32, (tr, 1), 0)
                _accumulate(jnp.where(row_ids < rows, sq, 0.0))

    return kernel


def _mse_partial_sums(x2d, t2d):
    """Partial sums of squared differences of two (rows, 128) arrays.

    Returns a (num_splits*8, 128) f32 array whose total equals
    sum((x - t)^2) over the slab."""
    rows, lane = x2d.shape
    assert lane == LANE and rows > 0

    def _plan(ns):
        tps = _cdiv(rows, ns * TR_MAX)
        tt = ns * tps
        t = _round_up(_cdiv(rows, tt), SUB)
        return ns, tps, tt, t

    num_splits, tiles_per_split, tiles_total, tr = _plan(_num_tensorcores_per_chip())
    if (tiles_total - 1) * tr >= rows:      # would create a fully OOB tile
        num_splits, tiles_per_split, tiles_total, tr = _plan(1)
    # Balanced tiling: every tile overlaps real rows; at most the last tile
    # is partial (handled by the in-kernel mask).
    assert (tiles_total - 1) * tr < rows <= tiles_total * tr
    ragged = tiles_total * tr != rows
    last_tile = tiles_total - 1

    def in_map(s, i):
        return (s * tiles_per_split + i, 0)

    itemsize = jnp.dtype(x2d.dtype).itemsize
    cost = pl.CostEstimate(
        flops=3 * rows * LANE,
        transcendentals=0,
        bytes_accessed=2 * rows * LANE * itemsize + num_splits * SUB * LANE * 4,
    )

    return pl.pallas_call(
        _make_mse_kernel(tr, rows, tiles_per_split, last_tile, ragged),
        out_shape=jax.ShapeDtypeStruct((num_splits * SUB, LANE), jnp.float32),
        grid=(num_splits, tiles_per_split),
        in_specs=[
            pl.BlockSpec((tr, LANE), in_map),
            pl.BlockSpec((tr, LANE), in_map),
        ],
        out_specs=pl.BlockSpec((SUB, LANE), lambda s, i: (s, 0)),
        compiler_params=pltpu.CompilerParams(
            dimension_semantics=("parallel", "arbitrary"),
            vmem_limit_bytes=_vmem_limit_bytes(),
        ),
        cost_estimate=cost,
    )(x2d, t2d)


def content_loss_forward(x, target):
    """Mimics ContentLoss.forward: returns (input, loss) with
    loss = F.mse_loss(input, target) (mean over all elements).
    The torch module stores the loss as an attribute; here we return both."""
    assert x.shape == target.shape
    n = x.size

    # Small-input fast path: launch overhead would dwarf the data movement.
    if n < SMALL_N:
        d = x.astype(jnp.float32) - target.astype(jnp.float32)
        return x, jnp.mean(d * d)

    flat_x = x.reshape(-1)
    flat_t = target.reshape(-1)

    n_main = (n // LANE) * LANE    # 128-aligned prefix -> zero-copy reshape
    rows = n_main // LANE

    # Ragged tail (< 128 elements): plain jnp, negligible traffic.
    if n_main < n:
        tx = jax.lax.slice(flat_x, (n_main,), (n,)).astype(jnp.float32)
        tt = jax.lax.slice(flat_t, (n_main,), (n,)).astype(jnp.float32)
        td = tx - tt
        tail_sum = jnp.sum(td * td)
    else:
        tail_sum = jnp.float32(0.0)

    if n_main == n:
        # Pure metadata reshape: no copy, no padding.
        x2d = flat_x.reshape(rows, LANE)
        t2d = flat_t.reshape(rows, LANE)
    else:
        # Only hit when n is not 128-aligned (rare for real feature maps).
        x2d = jax.lax.slice(flat_x, (0,), (n_main,)).reshape(rows, LANE)
        t2d = jax.lax.slice(flat_t, (0,), (n_main,)).reshape(rows, LANE)

    main_sum = jnp.sum(_mse_partial_sums(x2d, t2d), dtype=jnp.float32)
    loss = (main_sum + tail_sum) / jnp.float32(n)
    # forward() returns the input unchanged (pass-through).
    return x, loss


def _check(x, target, rtol=1e-5, atol=1e-6):
    out, loss = content_loss_forward(x, target)
    out = jax.block_until_ready(out)
    loss = jax.block_until_ready(loss)
    d = x.astype(jnp.float32) - target.astype(jnp.float32)
    ref = jnp.mean(d * d)
    assert jnp.allclose(loss, ref, rtol=rtol, atol=atol), (float(loss), float(ref))
    assert out is x or bool(jnp.array_equal(out, x))


if __name__ == "__main__":
    key = jax.random.PRNGKey(0)
    k = jax.random.split(key, 12)

    # 1) Primary small NCHW feature map (2048 elems -> XLA fast path).
    _check(jax.random.normal(k[0], (2, 4, 16, 16), jnp.float32),
           jax.random.normal(k[1], (2, 4, 16, 16), jnp.float32))

    # 2) Small, non-aligned element count (3200 elems -> XLA fast path).
    _check(jax.random.normal(k[2], (2, 4, 20, 20), jnp.float32),
           jax.random.normal(k[3], (2, 4, 20, 20), jnp.float32))

    # 3) Larger map -> kernel path with full tiles (393216 elems, rows=3072).
    _check(jax.random.normal(k[4], (2, 48, 64, 64), jnp.float32),
           jax.random.normal(k[5], (2, 48, 64, 64), jnp.float32))

    # 4) Kernel path with a partial last tile (rows=1001, not a multiple of 8).
    _check(jax.random.normal(k[6], (1001, 128), jnp.float32),
           jax.random.normal(k[7], (1001, 128), jnp.float32))

    # 5) Kernel path plus a non-128-aligned jnp tail (135000 elems).
    _check(jax.random.normal(k[8], (2, 3, 150, 150), jnp.float32),
           jax.random.normal(k[9], (2, 3, 150, 150), jnp.float32))

    # 6) bf16 inputs: read at native width, upcast to f32 inside the kernel.
    _check(jax.random.normal(k[10], (256, 512), jnp.bfloat16),
           jax.random.normal(k[11], (256, 512), jnp.bfloat16),
           rtol=1e-4, atol=1e-5)

    print("KERNEL_OK")
</pallas_src>

<mosaic_0001>
module attributes {stable_mosaic.version = 11 : i64} {
  func.func @kernel(%arg0: i32, %arg1: i32, %arg2: memref<3072x128xf32, #tpu.memory_space<vmem>>, %arg3: memref<3072x128xf32, #tpu.memory_space<vmem>>, %arg4: memref<8x128xf32, #tpu.memory_space<vmem>>) attributes {dimension_semantics = [#tpu.dimension_semantics<parallel>, #tpu.dimension_semantics<arbitrary>], iteration_bounds = array<i64: 1, 1>, scalar_prefetch = 0 : i64, scratch_operands = 0 : i64, tpu.core_type = #tpu.core_type<tc>, window_params = [{transform_indices = @transform_0, window_bounds = array<i64: 3072, 128>}, {transform_indices = @transform_1, window_bounds = array<i64: 3072, 128>}, {transform_indices = @transform_2, window_bounds = array<i64: 8, 128>}]} {
    %c0_i32 = arith.constant 0 : i32
    %0 = arith.cmpi eq, %arg1, %c0_i32 : i32
    %1 = arith.extui %0 : i1 to i32
    %c0_i32_0 = arith.constant 0 : i32
    %2 = arith.cmpi ne, %1, %c0_i32_0 : i32
    scf.if %2 {
      %cst_8 = arith.constant 0.000000e+00 : f32
      %12 = vector.broadcast %cst_8 : f32 to vector<8x128xf32>
      %c0_9 = arith.constant 0 : index
      %c0_10 = arith.constant 0 : index
      %13 = vector.load %arg4[%c0_9, %c0_10] : memref<8x128xf32, #tpu.memory_space<vmem>>, vector<8x128xf32>
      tpu.vector_store %arg4[%c0_9, %c0_10], %12 {strides = array<i32>} : memref<8x128xf32, #tpu.memory_space<vmem>>, vector<8x128xf32>,
    } else {
    }
    %c0 = arith.constant 0 : index
    %c0_1 = arith.constant 0 : index
    %3 = vector.load %arg2[%c0, %c0_1] : memref<3072x128xf32, #tpu.memory_space<vmem>>, vector<3072x128xf32>
    %c0_2 = arith.constant 0 : index
    %c0_3 = arith.constant 0 : index
    %4 = vector.load %arg3[%c0_2, %c0_3] : memref<3072x128xf32, #tpu.memory_space<vmem>>, vector<3072x128xf32>
    %5 = arith.subf %3, %4 : vector<3072x128xf32>
    %6 = arith.mulf %5, %5 : vector<3072x128xf32>
    %c0_4 = arith.constant 0 : index
    %c0_5 = arith.constant 0 : index
    %7 = vector.load %arg4[%c0_4, %c0_5] : memref<8x128xf32, #tpu.memory_space<vmem>>, vector<8x128xf32>
    %8 = vector.shape_cast %6 : vector<3072x128xf32> to vector<384x8x128xf32>
    %cst = arith.constant dense<0.000000e+00> : vector<8x128xf32>
    %9 = vector.multi_reduction <add>, %8, %cst [0] : vector<384x8x128xf32> to vector<8x128xf32>
    %10 = arith.addf %7, %9 : vector<8x128xf32>
    %c0_6 = arith.constant 0 : index
    %c0_7 = arith.constant 0 : index
    %11 = vector.load %arg4[%c0_6, %c0_7] : memref<8x128xf32, #tpu.memory_space<vmem>>, vector<8x128xf32>
    tpu.vector_store %arg4[%c0_6, %c0_7], %10 {strides = array<i32>} : memref<8x128xf32, #tpu.memory_space<vmem>>, vector<8x128xf32>,
    return
  }
  func.func @transform_0(%arg0: i32, %arg1: i32) -> (i32, i32) {
    %c1_i32 = arith.constant 1 : i32
    %0 = arith.muli %arg0, %c1_i32 : i32
    %1 = arith.addi %0, %arg1 : i32
    %c0_i32 = arith.constant 0 : i32
    %c0_i32_0 = arith.constant 0 : i32
    return %1, %c0_i32 : i32, i32
  }
  func.func @transform_1(%arg0: i32, %arg1: i32) -> (i32, i32) {
    %c1_i32 = arith.constant 1 : i32
    %0 = arith.muli %arg0, %c1_i32 : i32
    %1 = arith.addi %0, %arg1 : i32
    %c0_i32 = arith.constant 0 : i32
    %c0_i32_0 = arith.constant 0 : i32
    return %1, %c0_i32 : i32, i32
  }
  func.func @transform_2(%arg0: i32, %arg1: i32) -> (i32, i32) {
    %c0_i32 = arith.constant 0 : i32
    %c0_i32_0 = arith.constant 0 : i32
    return %arg0, %c0_i32 : i32, i32
  }
}

</mosaic_0001>

<llo_original>
// kernel: tpu_custom_call.1
$region0: #{tpu_custom_call.1}
  #allocation0 [shape = 'u32[]', space=smem, size = 0x4, offset = 0x4, fixed_abs, tag = 'smem constant byte address 0x4 - core index']
  #allocation1 [shape = 'u32[144,128]{1,0:T(1,128)}', space=vmem, size = 0x12000, scoped, tag = 'internal scratch']
  %s0 = inlined_call_operand.hbm [shape: f32[3072,128], index: 0, kind: input, shape index: {}]
  %s1 = inlined_call_operand.hbm [shape: f32[3072,128], index: 1, kind: input, shape index: {}]
  %s2 = inlined_call_operand.hbm [shape: f32[8,128], index: 2, kind: output, shape index: {}]
  %s3 = sld [smem:[#allocation0]]
  $region30: #{tpu_custom_call.1} parent=0
    _
  %s5 = ssub.s32 1, %s3
  %s6 = scalar_select 0, %s5, %s3
  $region1: #{tpu_custom_call.1} parent=0
    #allocation2 [shape = 'u8[1572864]{0}', space=vmem, size = 0x180000, scoped, tag = 'input window, operand 0, single buffered']
    #allocation3 [shape = 's32[1]{0}', space=sflag, size = 0x4, scoped, tag = 'scoped memory for tpu_custom_call.1']
    #allocation4 [shape = 's32[1]{0}', space=sflag, size = 0x4, scoped, tag = 'scoped memory for tpu_custom_call.1']
    #allocation5 [shape = 'u8[1572864]{0}', space=vmem, size = 0x180000, scoped, tag = 'input window, operand 1, single buffered']
    #allocation6 [shape = 's32[1]{0}', space=sflag, size = 0x4, scoped, tag = 'scoped memory for tpu_custom_call.1']
    #allocation7 [shape = 'u8[4096]{0}', space=vmem, size = 0x1000, scoped, tag = 'output window, operand 0, single buffered']
    %7 = vsyncpa [#allocation3], 0
    %8 = vsyncpa [#allocation6], 0
    %9 = vsyncpa [#allocation4], 0
    // Predicated region
    $region2: #{tpu_custom_call.1} parent=1 // pred_check
      _
    $region3: #{tpu_custom_call.1} parent=1 // pred_check_branch
      %11 = sbr.rel (0) target = $region5
    $region4: #{tpu_custom_call.1} parent=1 // pred_region
      %s12 = sadd.s32 0, 0
      %s13 = smul.u32 384, %s12
      %s15 = ssub.s32 49152, 49152
      %16 = vsyncadd [#allocation3], %s15
      %s17 = smul.addr %s13, 128
      %s18 = scalar_lea.hbm %s0, %s17
      %s19 = sshll.u32 [#allocation2], 4
      %s20 = int_to_ptr.vmem [resolvable:$true] %s19
      %25 = dma.hbm_to_vmem [thread:$0]  %s18, 49152, %s20, [#allocation3], 128, 128, 8
    $region5: #{tpu_custom_call.1} parent=1 // pred_fallthru
      _
    // Predicated region
    $region6: #{tpu_custom_call.1} parent=1 // pred_check
      _
    $region7: #{tpu_custom_call.1} parent=1 // pred_check_branch
      %27 = sbr.rel (0) target = $region9
    $region8: #{tpu_custom_call.1} parent=1 // pred_region
      %s28 = sadd.s32 0, 0
      %s29 = smul.u32 384, %s28
      %s31 = ssub.s32 49152, 49152
      %32 = vsyncadd [#allocation6], %s31
      %s33 = smul.addr %s29, 128
      %s34 = scalar_lea.hbm %s1, %s33
      %s35 = sshll.u32 [#allocation5], 4
      %s36 = int_to_ptr.vmem [resolvable:$true] %s35
      %41 = dma.hbm_to_vmem [thread:$0]  %s34, 49152, %s36, [#allocation6], 128, 128, 8
    $region9: #{tpu_custom_call.1} parent=1 // pred_fallthru
      _
    // Predicated region
    $region10: #{tpu_custom_call.1} parent=1 // pred_check
      _
    $region11: #{tpu_custom_call.1} parent=1 // pred_check_branch
      %43 = sbr.rel (0) target = $region13
    $region12: #{tpu_custom_call.1} parent=1 // pred_region
      %44 = dma.done [#allocation3], 49152
    $region13: #{tpu_custom_call.1} parent=1 // pred_fallthru
      _
    // Predicated region
    $region14: #{tpu_custom_call.1} parent=1 // pred_check
      _
    $region15: #{tpu_custom_call.1} parent=1 // pred_check_branch
      %46 = sbr.rel (0) target = $region17
    $region16: #{tpu_custom_call.1} parent=1 // pred_region
      %47 = dma.done [#allocation6], 49152
    $region17: #{tpu_custom_call.1} parent=1 // pred_fallthru
      _
    %s48 = sadd.s32 0, 0
    %s49 = smul.u32 384, %s48
    %s50 = sadd.s32 0, 0
    %s51 = smul.u32 384, %s50
    %p52 = scmp.eq.s32.totalorder 0, 0
    // Predicated region
    $region18: #{tpu_custom_call.1} parent=1 // pred_check
      %p53 = pneg %p52
    $region19: #{tpu_custom_call.1} parent=1 // pred_check_branch
      %55 = sbr.rel (%p53) target = $region21
    $region20: #{tpu_custom_call.1} parent=1 // pred_region
      %56 = vst [vmem:[#allocation7] sm:$0xff] 0.0
    $region21: #{tpu_custom_call.1} parent=1 // pred_fallthru
      _
    %v57 = vld [vmem:[#allocation2] sm:$0xff]
    %v58 = vld [vmem:[#allocation2 + $0x8] sm:$0xff]
    %v59 = vld [vmem:[#allocation2 + $0x10] sm:$0xff]
    %v60 = vld [vmem:[#allocation2 + $0x18] sm:$0xff]
    %v61 = vld [vmem:[#allocation2 + $0x20] sm:$0xff]
    %v62 = vld [vmem:[#allocation2 + $0x28] sm:$0xff]
    %v63 = vld [vmem:[#allocation2 + $0x30] sm:$0xff]
    %v64 = vld [vmem:[#allocation2 + $0x38] sm:$0xff]
    %v65 = vld [vmem:[#allocation2 + $0x40] sm:$0xff]
    %v66 = vld [vmem:[#allocation2 + $0x48] sm:$0xff]
    %v67 = vld [vmem:[#allocation2 + $0x50] sm:$0xff]
    %v68 = vld [vmem:[#allocation2 + $0x58] sm:$0xff]
    %v69 = vld [vmem:[#allocation2 + $0x60] sm:$0xff]
    %v70 = vld [vmem:[#allocation2 + $0x68] sm:$0xff]
    %v71 = vld [vmem:[#allocation2 + $0x70] sm:$0xff]
    %v72 = vld [vmem:[#allocation2 + $0x78] sm:$0xff]
    %v73 = vld [vmem:[#allocation2 + $0x80] sm:$0xff]
    %v74 = vld [vmem:[#allocation2 + $0x88] sm:$0xff]
    %v75 = vld [vmem:[#allocation2 + $0x90] sm:$0xff]
    %v76 = vld [vmem:[#allocation2 + $0x98] sm:$0xff]
    %v77 = vld [vmem:[#allocation2 + $0xa0] sm:$0xff]
    %v78 = vld [vmem:[#allocation2 + $0xa8] sm:$0xff]
    %v79 = vld [vmem:[#allocation2 + $0xb0] sm:$0xff]
    %v80 = vld [vmem:[#allocation2 + $0xb8] sm:$0xff]
    %v81 = vld [vmem:[#allocation2 + $0xc0] sm:$0xff]
    %v82 = vld [vmem:[#allocation2 + $0xc8] sm:$0xff]
    %v83 = vld [vmem:[#allocation2 + $0xd0] sm:$0xff]
    %v84 = vld [vmem:[#allocation2 + $0xd8] sm:$0xff]
    %v85 = vld [vmem:[#allocation2 + $0xe0] sm:$0xff]
    %v86 = vld [vmem:[#allocation2 + $0xe8] sm:$0xff]
    %v87 = vld [vmem:[#allocation2 + $0xf0] sm:$0xff]
    %v88 = vld [vmem:[#allocation2 + $0xf8] sm:$0xff]
    %v89 = vld [vmem:[#allocation2 + $0x100] sm:$0xff]
    %v90 = vld [vmem:[#allocation2 + $0x108] sm:$0xff]
    %v91 = vld [vmem:[#allocation2 + $0x110] sm:$0xff]
    %v92 = vld [vmem:[#allocation2 + $0x118] sm:$0xff]
    %v93 = vld [vmem:[#allocation2 + $0x120] sm:$0xff]
    %v94 = vld [vmem:[#allocation2 + $0x128] sm:$0xff]
    %v95 = vld [vmem:[#allocation2 + $0x130] sm:$0xff]
    %v96 = vld [vmem:[#allocation2 + $0x138] sm:$0xff]
    %v97 = vld [vmem:[#allocation2 + $0x140] sm:$0xff]
    %v98 = vld [vmem:[#allocation2 + $0x148] sm:$0xff]
    %v99 = vld [vmem:[#allocation2 + $0x150] sm:$0xff]
    %v100 = vld [vmem:[#allocation2 + $0x158] sm:$0xff]
    %v101 = vld [vmem:[#allocation2 + $0x160] sm:$0xff]
    %v102 = vld [vmem:[#allocation2 + $0x168] sm:$0xff]
    %v103 = vld [vmem:[#allocation2 + $0x170] sm:$0xff]
    %v104 = vld [vmem:[#allocation2 + $0x178] sm:$0xff]
    %v105 = vld [vmem:[#allocation2 + $0x180] sm:$0xff]
    %v106 = vld [vmem:[#allocation2 + $0x188] sm:$0xff]
    %v107 = vld [vmem:[#allocation2 + $0x190] sm:$0xff]
    %v108 = vld [vmem:[#allocation2 + $0x198] sm:$0xff]
    %v109 = vld [vmem:[#allocation2 + $0x1a0] sm:$0xff]
    %v110 = vld [vmem:[#allocation2 + $0x1a8] sm:$0xff]
    %v111 = vld [vmem:[#allocation2 + $0x1b0] sm:$0xff]
    %v112 = vld [vmem:[#allocation2 + $0x1b8] sm:$0xff]
    %v113 = vld [vmem:[#allocation2 + $0x1c0] sm:$0xff]
    %v114 = vld [vmem:[#allocation2 + $0x1c8] sm:$0xff]
    %v115 = vld [vmem:[#allocation2 + $0x1d0] sm:$0xff]
    %v116 = vld [vmem:[#allocation2 + $0x1d8] sm:$0xff]
    %v117 = vld [vmem:[#allocation2 + $0x1e0] sm:$0xff]
    %v118 = vld [vmem:[#allocation2 + $0x1e8] sm:$0xff]
    %v119 = vld [vmem:[#allocation2 + $0x1f0] sm:$0xff]
    %v120 = vld [vmem:[#allocation2 + $0x1f8] sm:$0xff]
    %v121 = vld [vmem:[#allocation2 + $0x200] sm:$0xff]
    %v122 = vld [vmem:[#allocation2 + $0x208] sm:$0xff]
    %v123 = vld [vmem:[#allocation2 + $0x210] sm:$0xff]
    %v124 = vld [vmem:[#allocation2 + $0x218] sm:$0xff]
    %v125 = vld [vmem:[#allocation2 + $0x220] sm:$0xff]
    %v126 = vld [vmem:[#allocation2 + $0x228] sm:$0xff]
    %v127 = vld [vmem:[#allocation2 + $0x230] sm:$0xff]
    %v128 = vld [vmem:[#allocation2 + $0x238] sm:$0xff]
    %v129 = vld [vmem:[#allocation2 + $0x240] sm:$0xff]
    %v130 = vld [vmem:[#allocation2 + $0x248] sm:$0xff]
    %v131 = vld [vmem:[#allocation2 + $0x250] sm:$0xff]
    %v132 = vld [vmem:[#allocation2 + $0x258] sm:$0xff]
    %v133 = vld [vmem:[#allocation2 + $0x260] sm:$0xff]
    %v134 = vld [vmem:[#allocation2 + $0x268] sm:$0xff]
    %v135 = vld [vmem:[#allocation2 + $0x270] sm:$0xff]
    %v136 = vld [vmem:[#allocation2 + $0x278] sm:$0xff]
    %v137 = vld [vmem:[#allocation2 + $0x280] sm:$0xff]
    %v138 = vld [vmem:[#allocation2 + $0x288] sm:$0xff]
    %v139 = vld [vmem:[#allocation2 + $0x290] sm:$0xff]
    %v140 = vld [vmem:[#allocation2 + $0x298] sm:$0xff]
    %v141 = vld [vmem:[#allocation2 + $0x2a0] sm:$0xff]
    %v142 = vld [vmem:[#allocation2 + $0x2a8] sm:$0xff]
    %v143 = vld [vmem:[#allocation2 + $0x2b0] sm:$0xff]
    %v144 = vld [vmem:[#allocation2 + $0x2b8] sm:$0xff]
    %v145 = vld [vmem:[#allocation2 + $0x2c0] sm:$0xff]
    %v146 = vld [vmem:[#allocation2 + $0x2c8] sm:$0xff]
    %v147 = vld [vmem:[#allocation2 + $0x2d0] sm:$0xff]
    %v148 = vld [vmem:[#allocation2 + $0x2d8] sm:$0xff]
    %v149 = vld [vmem:[#allocation2 + $0x2e0] sm:$0xff]
    %v150 = vld [vmem:[#allocation2 + $0x2e8] sm:$0xff]
    %v151 = vld [vmem:[#allocation2 + $0x2f0] sm:$0xff]
    %v152 = vld [vmem:[#allocation2 + $0x2f8] sm:$0xff]
    %v153 = vld [vmem:[#allocation2 + $0x300] sm:$0xff]
    %v154 = vld [vmem:[#allocation2 + $0x308] sm:$0xff]
    %v155 = vld [vmem:[#allocation2 + $0x310] sm:$0xff]
    %v156 = vld [vmem:[#allocation2 + $0x318] sm:$0xff]
    %v157 = vld [vmem:[#allocation2 + $0x320] sm:$0xff]
    %v158 = vld [vmem:[#allocation2 + $0x328] sm:$0xff]
    %v159 = vld [vmem:[#allocation2 + $0x330] sm:$0xff]
    %v160 = vld [vmem:[#allocation2 + $0x338] sm:$0xff]
    %v161 = vld [vmem:[#allocation2 + $0x340] sm:$0xff]
    %v162 = vld [vmem:[#allocation2 + $0x348] sm:$0xff]
    %v163 = vld [vmem:[#allocation2 + $0x350] sm:$0xff]
    %v164 = vld [vmem:[#allocation2 + $0x358] sm:$0xff]
    %v165 = vld [vmem:[#allocation2 + $0x360] sm:$0xff]
    %v166 = vld [vmem:[#allocation2 + $0x368] sm:$0xff]
    %v167 = vld [vmem:[#allocation2 + $0x370] sm:$0xff]
    %v168 = vld [vmem:[#allocation2 + $0x378] sm:$0xff]
    %v169 = vld [vmem:[#allocation2 + $0x380] sm:$0xff]
    %v170 = vld [vmem:[#allocation2 + $0x388] sm:$0xff]
    %v171 = vld [vmem:[#allocation2 + $0x390] sm:$0xff]
    %v172 = vld [vmem:[#allocation2 + $0x398] sm:$0xff]
    %v173 = vld [vmem:[#allocation2 + $0x3a0] sm:$0xff]
    %v174 = vld [vmem:[#allocation2 + $0x3a8] sm:$0xff]
    %v175 = vld [vmem:[#allocation2 + $0x3b0] sm:$0xff]
    %v176 = vld [vmem:[#allocation2 + $0x3b8] sm:$0xff]
    %v177 = vld [vmem:[#allocation2 + $0x3c0] sm:$0xff]
    %v178 = vld [vmem:[#allocation2 + $0x3c8] sm:$0xff]
    %v179 = vld [vmem:[#allocation2 + $0x3d0] sm:$0xff]
    %v180 = vld [vmem:[#allocation2 + $0x3d8] sm:$0xff]
    %v181 = vld [vmem:[#allocation2 + $0x3e0] sm:$0xff]
    %v182 = vld [vmem:[#allocation2 + $0x3e8] sm:$0xff]
    %v183 = vld [vmem:[#allocation2 + $0x3f0] sm:$0xff]
    %v184 = vld [vmem:[#allocation2 + $0x3f8] sm:$0xff]
    %v185 = vld [vmem:[#allocation2 + $0x400] sm:$0xff]
    %v186 = vld [vmem:[#allocation2 + $0x408] sm:$0xff]
    %v187 = vld [vmem:[#allocation2 + $0x410] sm:$0xff]
    %v188 = vld [vmem:[#allocation2 + $0x418] sm:$0xff]
    %v189 = vld [vmem:[#allocation2 + $0x420] sm:$0xff]
    %v190 = vld [vmem:[#allocation2 + $0x428] sm:$0xff]
    %v191 = vld [vmem:[#allocation2 + $0x430] sm:$0xff]
    %v192 = vld [vmem:[#allocation2 + $0x438] sm:$0xff]
    %v193 = vld [vmem:[#allocation2 + $0x440] sm:$0xff]
    %v194 = vld [vmem:[#allocation2 + $0x448] sm:$0xff]
    %v195 = vld [vmem:[#allocation2 + $0x450] sm:$0xff]
    %v196 = vld [vmem:[#allocation2 + $0x458] sm:$0xff]
    %v197 = vld [vmem:[#allocation2 + $0x460] sm:$0xff]
    %v198 = vld [vmem:[#allocation2 + $0x468] sm:$0xff]
    %v199 = vld [vmem:[#allocation2 + $0x470] sm:$0xff]
    %v200 = vld [vmem:[#allocation2 + $0x478] sm:$0xff]
    %v201 = vld [vmem:[#allocation2 + $0x480] sm:$0xff]
    %v202 = vld [vmem:[#allocation2 + $0x488] sm:$0xff]
    %v203 = vld [vmem:[#allocation2 + $0x490] sm:$0xff]
    %v204 = vld [vmem:[#allocation2 + $0x498] sm:$0xff]
    %v205 = vld [vmem:[#allocation2 + $0x4a0] sm:$0xff]
    %v206 = vld [vmem:[#allocation2 + $0x4a8] sm:$0xff]
    %v207 = vld [vmem:[#allocation2 + $0x4b0] sm:$0xff]
    %v208 = vld [vmem:[#allocation2 + $0x4b8] sm:$0xff]
    %v209 = vld [vmem:[#allocation2 + $0x4c0] sm:$0xff]
    %v210 = vld [vmem:[#allocation2 + $0x4c8] sm:$0xff]
    %v211 = vld [vmem:[#allocation2 + $0x4d0] sm:$0xff]
    %v212 = vld [vmem:[#allocation2 + $0x4d8] sm:$0xff]
    %v213 = vld [vmem:[#allocation2 + $0x4e0] sm:$0xff]
    %v214 = vld [vmem:[#allocation2 + $0x4e8] sm:$0xff]
    %v215 = vld [vmem:[#allocation2 + $0x4f0] sm:$0xff]
    %v216 = vld [vmem:[#allocation2 + $0x4f8] sm:$0xff]
    %v217 = vld [vmem:[#allocation2 + $0x500] sm:$0xff]
    %v218 = vld [vmem:[#allocation2 + $0x508] sm:$0xff]
    %v219 = vld [vmem:[#allocation2 + $0x510] sm:$0xff]
    %v220 = vld [vmem:[#allocation2 + $0x518] sm:$0xff]
    %v221 = vld [vmem:[#allocation2 + $0x520] sm:$0xff]
    %v222 = vld [vmem:[#allocation2 + $0x528] sm:$0xff]
    %v223 = vld [vmem:[#allocation2 + $0x530] sm:$0xff]
    %v224 = vld [vmem:[#allocation2 + $0x538] sm:$0xff]
    %v225 = vld [vmem:[#allocation2 + $0x540] sm:$0xff]
    %v226 = vld [vmem:[#allocation2 + $0x548] sm:$0xff]
    %v227 = vld [vmem:[#allocation2 + $0x550] sm:$0xff]
    %v228 = vld [vmem:[#allocation2 + $0x558] sm:$0xff]
    %v229 = vld [vmem:[#allocation2 + $0x560] sm:$0xff]
    %v230 = vld [vmem:[#allocation2 + $0x568] sm:$0xff]
    %v231 = vld [vmem:[#allocation2 + $0x570] sm:$0xff]
    %v232 = vld [vmem:[#allocation2 + $0x578] sm:$0xff]
    %v233 = vld [vmem:[#allocation2 + $0x580] sm:$0xff]
    %v234 = vld [vmem:[#allocation2 + $0x588] sm:$0xff]
    %v235 = vld [vmem:[#allocation2 + $0x590] sm:$0xff]
    %v236 = vld [vmem:[#allocation2 + $0x598] sm:$0xff]
    %v237 = vld [vmem:[#allocation2 + $0x5a0] sm:$0xff]
    %v238 = vld [vmem:[#allocation2 + $0x5a8] sm:$0xff]
    %v239 = vld [vmem:[#allocation2 + $0x5b0] sm:$0xff]
    %v240 = vld [vmem:[#allocation2 + $0x5b8] sm:$0xff]
    %v241 = vld [vmem:[#allocation2 + $0x5c0] sm:$0xff]
    %v242 = vld [vmem:[#allocation2 + $0x5c8] sm:$0xff]
    %v243 = vld [vmem:[#allocation2 + $0x5d0] sm:$0xff]
    %v244 = vld [vmem:[#allocation2 + $0x5d8] sm:$0xff]
    %v245 = vld [vmem:[#allocation2 + $0x5e0] sm:$0xff]
    %v246 = vld [vmem:[#allocation2 + $0x5e8] sm:$0xff]
    %v247 = vld [vmem:[#allocation2 + $0x5f0] sm:$0xff]
    %v248 = vld [vmem:[#allocation2 + $0x5f8] sm:$0xff]
    %v249 = vld [vmem:[#allocation2 + $0x600] sm:$0xff]
    %v250 = vld [vmem:[#allocation2 + $0x608] sm:$0xff]
    %v251 = vld [vmem:[#allocation2 + $0x610] sm:$0xff]
    %v252 = vld [vmem:[#allocation2 + $0x618] sm:$0xff]
    %v253 = vld [vmem:[#allocation2 + $0x620] sm:$0xff]
    %v254 = vld [vmem:[#allocation2 + $0x628] sm:$0xff]
    %v255 = vld [vmem:[#allocation2 + $0x630] sm:$0xff]
    %v256 = vld [vmem:[#allocation2 + $0x638] sm:$0xff]
    %v257 = vld [vmem:[#allocation2 + $0x640] sm:$0xff]
    %v258 = vld [vmem:[#allocation2 + $0x648] sm:$0xff]
    %v259 = vld [vmem:[#allocation2 + $0x650] sm:$0xff]
    %v260 = vld [vmem:[#allocation2 + $0x658] sm:$0xff]
    %v261 = vld [vmem:[#allocation2 + $0x660] sm:$0xff]
    %v262 = vld [vmem:[#allocation2 + $0x668] sm:$0xff]
    %v263 = vld [vmem:[#allocation2 + $0x670] sm:$0xff]
    %v264 = vld [vmem:[#allocation2 + $0x678] sm:$0xff]
    %v265 = vld [vmem:[#allocation2 + $0x680] sm:$0xff]
    %v266 = vld [vmem:[#allocation2 + $0x688] sm:$0xff]
    %v267 = vld [vmem:[#allocation2 + $0x690] sm:$0xff]
    %v268 = vld [vmem:[#allocation2 + $0x698] sm:$0xff]
    %v269 = vld [vmem:[#allocation2 + $0x6a0] sm:$0xff]
    %v270 = vld [vmem:[#allocation2 + $0x6a8] sm:$0xff]
    %v271 = vld [vmem:[#allocation2 + $0x6b0] sm:$0xff]
    %v272 = vld [vmem:[#allocation2 + $0x6b8] sm:$0xff]
    %v273 = vld [vmem:[#allocation2 + $0x6c0] sm:$0xff]
    %v274 = vld [vmem:[#allocation2 + $0x6c8] sm:$0xff]
    %v275 = vld [vmem:[#allocation2 + $0x6d0] sm:$0xff]
    %v276 = vld [vmem:[#allocation2 + $0x6d8] sm:$0xff]
    %v277 = vld [vmem:[#allocation2 + $0x6e0] sm:$0xff]
    %v278 = vld [vmem:[#allocation2 + $0x6e8] sm:$0xff]
    %v279 = vld [vmem:[#allocation2 + $0x6f0] sm:$0xff]
    %v280 = vld [vmem:[#allocation2 + $0x6f8] sm:$0xff]
    %v281 = vld [vmem:[#allocation2 + $0x700] sm:$0xff]
    %v282 = vld [vmem:[#allocation2 + $0x708] sm:$0xff]
    %v283 = vld [vmem:[#allocation2 + $0x710] sm:$0xff]
    %v284 = vld [vmem:[#allocation2 + $0x718] sm:$0xff]
    %v285 = vld [vmem:[#allocation2 + $0x720] sm:$0xff]
    %v286 = vld [vmem:[#allocation2 + $0x728] sm:$0xff]
    %v287 = vld [vmem:[#allocation2 + $0x730] sm:$0xff]
    %v288 = vld [vmem:[#allocation2 + $0x738] sm:$0xff]
    %v289 = vld [vmem:[#allocation2 + $0x740] sm:$0xff]
    %v290 = vld [vmem:[#allocation2 + $0x748] sm:$0xff]
    %v291 = vld [vmem:[#allocation2 + $0x750] sm:$0xff]
    %v292 = vld [vmem:[#allocation2 + $0x758] sm:$0xff]
    %v293 = vld [vmem:[#allocation2 + $0x760] sm:$0xff]
    %v294 = vld [vmem:[#allocation2 + $0x768] sm:$0xff]
    %v295 = vld [vmem:[#allocation2 + $0x770] sm:$0xff]
    %v296 = vld [vmem:[#allocation2 + $0x778] sm:$0xff]
    %v297 = vld [vmem:[#allocation2 + $0x780] sm:$0xff]
    %v298 = vld [vmem:[#allocation2 + $0x788] sm:$0xff]
    %v299 = vld [vmem:[#allocation2 + $0x790] sm:$0xff]
    %v300 = vld [vmem:[#allocation2 + $0x798] sm:$0xff]
    %v301 = vld [vmem:[#allocation2 + $0x7a0] sm:$0xff]
    %v302 = vld [vmem:[#allocation2 + $0x7a8] sm:$0xff]
    %v303 = vld [vmem:[#allocation2 + $0x7b0] sm:$0xff]
    %v304 = vld [vmem:[#allocation2 + $0x7b8] sm:$0xff]
    %v305 = vld [vmem:[#allocation2 + $0x7c0] sm:$0xff]
    %v306 = vld [vmem:[#allocation2 + $0x7c8] sm:$0xff]
    %v307 = vld [vmem:[#allocation2 + $0x7d0] sm:$0xff]
    %v308 = vld [vmem:[#allocation2 + $0x7d8] sm:$0xff]
    %v309 = vld [vmem:[#allocation2 + $0x7e0] sm:$0xff]
    %v310 = vld [vmem:[#allocation2 + $0x7e8] sm:$0xff]
    %v311 = vld [vmem:[#allocation2 + $0x7f0] sm:$0xff]
    %v312 = vld [vmem:[#allocation2 + $0x7f8] sm:$0xff]
    %v313 = vld [vmem:[#allocation2 + $0x800] sm:$0xff]
    %v314 = vld [vmem:[#allocation2 + $0x808] sm:$0xff]
    %v315 = vld [vmem:[#allocation2 + $0x810] sm:$0xff]
    %v316 = vld [vmem:[#allocation2 + $0x818] sm:$0xff]
    %v317 = vld [vmem:[#allocation2 + $0x820] sm:$0xff]
    %v318 = vld [vmem:[#allocation2 + $0x828] sm:$0xff]
    %v319 = vld [vmem:[#allocation2 + $0x830] sm:$0xff]
    %v320 = vld [vmem:[#allocation2 + $0x838] sm:$0xff]
    %v321 = vld [vmem:[#allocation2 + $0x840] sm:$0xff]
    %v322 = vld [vmem:[#allocation2 + $0x848] sm:$0xff]
    %v323 = vld [vmem:[#allocation2 + $0x850] sm:$0xff]
    %v324 = vld [vmem:[#allocation2 + $0x858] sm:$0xff]
    %v325 = vld [vmem:[#allocation2 + $0x860] sm:$0xff]
    %v326 = vld [vmem:[#allocation2 + $0x868] sm:$0xff]
    %v327 = vld [vmem:[#allocation2 + $0x870] sm:$0xff]
    %v328 = vld [vmem:[#allocation2 + $0x878] sm:$0xff]
    %v329 = vld [vmem:[#allocation2 + $0x880] sm:$0xff]
    %v330 = vld [vmem:[#allocation2 + $0x888] sm:$0xff]
    %v331 = vld [vmem:[#allocation2 + $0x890] sm:$0xff]
    %v332 = vld [vmem:[#allocation2 + $0x898] sm:$0xff]
    %v333 = vld [vmem:[#allocation2 + $0x8a0] sm:$0xff]
    %v334 = vld [vmem:[#allocation2 + $0x8a8] sm:$0xff]
    %v335 = vld [vmem:[#allocation2 + $0x8b0] sm:$0xff]
    %v336 = vld [vmem:[#allocation2 + $0x8b8] sm:$0xff]
    %v337 = vld [vmem:[#allocation2 + $0x8c0] sm:$0xff]
    %v338 = vld [vmem:[#allocation2 + $0x8c8] sm:$0xff]
    %v339 = vld [vmem:[#allocation2 + $0x8d0] sm:$0xff]
    %v340 = vld [vmem:[#allocation2 + $0x8d8] sm:$0xff]
    %v341 = vld [vmem:[#allocation2 + $0x8e0] sm:$0xff]
    %v342 = vld [vmem:[#allocation2 + $0x8e8] sm:$0xff]
    %v343 = vld [vmem:[#allocation2 + $0x8f0] sm:$0xff]
    %v344 = vld [vmem:[#allocation2 + $0x8f8] sm:$0xff]
    %v345 = vld [vmem:[#allocation2 + $0x900] sm:$0xff]
    %v346 = vld [vmem:[#allocation2 + $0x908] sm:$0xff]
    %v347 = vld [vmem:[#allocation2 + $0x910] sm:$0xff]
    %v348 = vld [vmem:[#allocation2 + $0x918] sm:$0xff]
    %v349 = vld [vmem:[#allocation2 + $0x920] sm:$0xff]
    %v350 = vld [vmem:[#allocation2 + $0x928] sm:$0xff]
    %v351 = vld [vmem:[#allocation2 + $0x930] sm:$0xff]
    %v352 = vld [vmem:[#allocation2 + $0x938] sm:$0xff]
    %v353 = vld [vmem:[#allocation2 + $0x940] sm:$0xff]
    %v354 = vld [vmem:[#allocation2 + $0x948] sm:$0xff]
    %v355 = vld [vmem:[#allocation2 + $0x950] sm:$0xff]
    %v356 = vld [vmem:[#allocation2 + $0x958] sm:$0xff]
    %v357 = vld [vmem:[#allocation2 + $0x960] sm:$0xff]
    %v358 = vld [vmem:[#allocation2 + $0x968] sm:$0xff]
    %v359 = vld [vmem:[#allocation2 + $0x970] sm:$0xff]
    %v360 = vld [vmem:[#allocation2 + $0x978] sm:$0xff]
    %v361 = vld [vmem:[#allocation2 + $0x980] sm:$0xff]
    %v362 = vld [vmem:[#allocation2 + $0x988] sm:$0xff]
    %v363 = vld [vmem:[#allocation2 + $0x990] sm:$0xff]
    %v364 = vld [vmem:[#allocation2 + $0x998] sm:$0xff]
    %v365 = vld [vmem:[#allocation2 + $0x9a0] sm:$0xff]
    %v366 = vld [vmem:[#allocation2 + $0x9a8] sm:$0xff]
    %v367 = vld [vmem:[#allocation2 + $0x9b0] sm:$0xff]
    %v368 = vld [vmem:[#allocation2 + $0x9b8] sm:$0xff]
    %v369 = vld [vmem:[#allocation2 + $0x9c0] sm:$0xff]
    %v370 = vld [vmem:[#allocation2 + $0x9c8] sm:$0xff]
    %v371 = vld [vmem:[#allocation2 + $0x9d0] sm:$0xff]
    %v372 = vld [vmem:[#allocation2 + $0x9d8] sm:$0xff]
    %v373 = vld [vmem:[#allocation2 + $0x9e0] sm:$0xff]
    %v374 = vld [vmem:[#allocation2 + $0x9e8] sm:$0xff]
    %v375 = vld [vmem:[#allocation2 + $0x9f0] sm:$0xff]
    %v376 = vld [vmem:[#allocation2 + $0x9f8] sm:$0xff]
    %v377 = vld [vmem:[#allocation2 + $0xa00] sm:$0xff]
    %v378 = vld [vmem:[#allocation2 + $0xa08] sm:$0xff]
    %v379 = vld [vmem:[#allocation2 + $0xa10] sm:$0xff]
    %v380 = vld [vmem:[#allocation2 + $0xa18] sm:$0xff]
    %v381 = vld [vmem:[#allocation2 + $0xa20] sm:$0xff]
    %v382 = vld [vmem:[#allocation2 + $0xa28] sm:$0xff]
    %v383 = vld [vmem:[#allocation2 + $0xa30] sm:$0xff]
    %v384 = vld [vmem:[#allocation2 + $0xa38] sm:$0xff]
    %v385 = vld [vmem:[#allocation2 + $0xa40] sm:$0xff]
    %v386 = vld [vmem:[#allocation2 + $0xa48] sm:$0xff]
    %v387 = vld [vmem:[#allocation2 + $0xa50] sm:$0xff]
    %v388 = vld [vmem:[#allocation2 + $0xa58] sm:$0xff]
    %v389 = vld [vmem:[#allocation2 + $0xa60] sm:$0xff]
    %v390 = vld [vmem:[#allocation2 + $0xa68] sm:$0xff]
    %v391 = vld [vmem:[#allocation2 + $0xa70] sm:$0xff]
    %v392 = vld [vmem:[#allocation2 + $0xa78] sm:$0xff]
    %v393 = vld [vmem:[#allocation2 + $0xa80] sm:$0xff]
    %v394 = vld [vmem:[#allocation2 + $0xa88] sm:$0xff]
    %v395 = vld [vmem:[#allocation2 + $0xa90] sm:$0xff]
    %v396 = vld [vmem:[#allocation2 + $0xa98] sm:$0xff]
    %v397 = vld [vmem:[#allocation2 + $0xaa0] sm:$0xff]
    %v398 = vld [vmem:[#allocation2 + $0xaa8] sm:$0xff]
    %v399 = vld [vmem:[#allocation2 + $0xab0] sm:$0xff]
    %v400 = vld [vmem:[#allocation2 + $0xab8] sm:$0xff]
    %v401 = vld [vmem:[#allocation2 + $0xac0] sm:$0xff]
    %v402 = vld [vmem:[#allocation2 + $0xac8] sm:$0xff]
    %v403 = vld [vmem:[#allocation2 + $0xad0] sm:$0xff]
    %v404 = vld [vmem:[#allocation2 + $0xad8] sm:$0xff]
    %v405 = vld [vmem:[#allocation2 + $0xae0] sm:$0xff]
    %v406 = vld [vmem:[#allocation2 + $0xae8] sm:$0xff]
    %v407 = vld [vmem:[#allocation2 + $0xaf0] sm:$0xff]
    %v408 = vld [vmem:[#allocation2 + $0xaf8] sm:$0xff]
    %v409 = vld [vmem:[#allocation2 + $0xb00] sm:$0xff]
    %v410 = vld [vmem:[#allocation2 + $0xb08] sm:$0xff]
    %v411 = vld [vmem:[#allocation2 + $0xb10] sm:$0xff]
    %v412 = vld [vmem:[#allocation2 + $0xb18] sm:$0xff]
    %v413 = vld [vmem:[#allocation2 + $0xb20] sm:$0xff]
    %v414 = vld [vmem:[#allocation2 + $0xb28] sm:$0xff]
    %v415 = vld [vmem:[#allocation2 + $0xb30] sm:$0xff]
    %v416 = vld [vmem:[#allocation2 + $0xb38] sm:$0xff]
    %v417 = vld [vmem:[#allocation2 + $0xb40] sm:$0xff]
    %v418 = vld [vmem:[#allocation2 + $0xb48] sm:$0xff]
    %v419 = vld [vmem:[#allocation2 + $0xb50] sm:$0xff]
    %v420 = vld [vmem:[#allocation2 + $0xb58] sm:$0xff]
    %v421 = vld [vmem:[#allocation2 + $0xb60] sm:$0xff]
    %v422 = vld [vmem:[#allocation2 + $0xb68] sm:$0xff]
    %v423 = vld [vmem:[#allocation2 + $0xb70] sm:$0xff]
    %v424 = vld [vmem:[#allocation2 + $0xb78] sm:$0xff]
    %v425 = vld [vmem:[#allocation2 + $0xb80] sm:$0xff]
    %v426 = vld [vmem:[#allocation2 + $0xb88] sm:$0xff]
    %v427 = vld [vmem:[#allocation2 + $0xb90] sm:$0xff]
    %v428 = vld [vmem:[#allocation2 + $0xb98] sm:$0xff]
    %v429 = vld [vmem:[#allocation2 + $0xba0] sm:$0xff]
    %v430 = vld [vmem:[#allocation2 + $0xba8] sm:$0xff]
    %v431 = vld [vmem:[#allocation2 + $0xbb0] sm:$0xff]
    %v432 = vld [vmem:[#allocation2 + $0xbb8] sm:$0xff]
    %v433 = vld [vmem:[#allocation2 + $0xbc0] sm:$0xff]
    %v434 = vld [vmem:[#allocation2 + $0xbc8] sm:$0xff]
    %v435 = vld [vmem:[#allocation2 + $0xbd0] sm:$0xff]
    %v436 = vld [vmem:[#allocation2 + $0xbd8] sm:$0xff]
    %v437 = vld [vmem:[#allocation2 + $0xbe0] sm:$0xff]
    %v438 = vld [vmem:[#allocation2 + $0xbe8] sm:$0xff]
    %v439 = vld [vmem:[#allocation2 + $0xbf0] sm:$0xff]
    %v440 = vld [vmem:[#allocation2 + $0xbf8] sm:$0xff]
    %v441 = vld [vmem:[#allocation5] sm:$0xff]
    %v442 = vld [vmem:[#allocation5 + $0x8] sm:$0xff]
    %v443 = vld [vmem:[#allocation5 + $0x10] sm:$0xff]
    %v444 = vld [vmem:[#allocation5 + $0x18] sm:$0xff]
    %v445 = vld [vmem:[#allocation5 + $0x20] sm:$0xff]
    %v446 = vld [vmem:[#allocation5 + $0x28] sm:$0xff]
    %v447 = vld [vmem:[#allocation5 + $0x30] sm:$0xff]
    %v448 = vld [vmem:[#allocation5 + $0x38] sm:$0xff]
    %v449 = vld [vmem:[#allocation5 + $0x40] sm:$0xff]
    %v450 = vld [vmem:[#allocation5 + $0x48] sm:$0xff]
    %v451 = vld [vmem:[#allocation5 + $0x50] sm:$0xff]
    %v452 = vld [vmem:[#allocation5 + $0x58] sm:$0xff]
    %v453 = vld [vmem:[#allocation5 + $0x60] sm:$0xff]
    %v454 = vld [vmem:[#allocation5 + $0x68] sm:$0xff]
    %v455 = vld [vmem:[#allocation5 + $0x70] sm:$0xff]
    %v456 = vld [vmem:[#allocation5 + $0x78] sm:$0xff]
    %v457 = vld [vmem:[#allocation5 + $0x80] sm:$0xff]
    %v458 = vld [vmem:[#allocation5 + $0x88] sm:$0xff]
    %v459 = vld [vmem:[#allocation5 + $0x90] sm:$0xff]
    %v460 = vld [vmem:[#allocation5 + $0x98] sm:$0xff]
    %v461 = vld [vmem:[#allocation5 + $0xa0] sm:$0xff]
    %v462 = vld [vmem:[#allocation5 + $0xa8] sm:$0xff]
    %v463 = vld [vmem:[#allocation5 + $0xb0] sm:$0xff]
    %v464 = vld [vmem:[#allocation5 + $0xb8] sm:$0xff]
    %v465 = vld [vmem:[#allocation5 + $0xc0] sm:$0xff]
    %v466 = vld [vmem:[#allocation5 + $0xc8] sm:$0xff]
    %v467 = vld [vmem:[#allocation5 + $0xd0] sm:$0xff]
    %v468 = vld [vmem:[#allocation5 + $0xd8] sm:$0xff]
    %v469 = vld [vmem:[#allocation5 + $0xe0] sm:$0xff]
    %v470 = vld [vmem:[#allocation5 + $0xe8] sm:$0xff]
    %v471 = vld [vmem:[#allocation5 + $0xf0] sm:$0xff]
    %v472 = vld [vmem:[#allocation5 + $0xf8] sm:$0xff]
    %v473 = vld [vmem:[#allocation5 + $0x100] sm:$0xff]
    %v474 = vld [vmem:[#allocation5 + $0x108] sm:$0xff]
    %v475 = vld [vmem:[#allocation5 + $0x110] sm:$0xff]
    %v476 = vld [vmem:[#allocation5 + $0x118] sm:$0xff]
    %v477 = vld [vmem:[#allocation5 + $0x120] sm:$0xff]
    %v478 = vld [vmem:[#allocation5 + $0x128] sm:$0xff]
    %v479 = vld [vmem:[#allocation5 + $0x130] sm:$0xff]
    %v480 = vld [vmem:[#allocation5 + $0x138] sm:$0xff]
    %v481 = vld [vmem:[#allocation5 + $0x140] sm:$0xff]
    %v482 = vld [vmem:[#allocation5 + $0x148] sm:$0xff]
    %v483 = vld [vmem:[#allocation5 + $0x150] sm:$0xff]
    %v484 = vld [vmem:[#allocation5 + $0x158] sm:$0xff]
    %v485 = vld [vmem:[#allocation5 + $0x160] sm:$0xff]
    %v486 = vld [vmem:[#allocation5 + $0x168] sm:$0xff]
    %v487 = vld [vmem:[#allocation5 + $0x170] sm:$0xff]
    %v488 = vld [vmem:[#allocation5 + $0x178] sm:$0xff]
    %v489 = vld [vmem:[#allocation5 + $0x180] sm:$0xff]
    %v490 = vld [vmem:[#allocation5 + $0x188] sm:$0xff]
    %v491 = vld [vmem:[#allocation5 + $0x190] sm:$0xff]
    %v492 = vld [vmem:[#allocation5 + $0x198] sm:$0xff]
    %v493 = vld [vmem:[#allocation5 + $0x1a0] sm:$0xff]
    %v494 = vld [vmem:[#allocation5 + $0x1a8] sm:$0xff]
    %v495 = vld [vmem:[#allocation5 + $0x1b0] sm:$0xff]
    %v496 = vld [vmem:[#allocation5 + $0x1b8] sm:$0xff]
    %v497 = vld [vmem:[#allocation5 + $0x1c0] sm:$0xff]
    %v498 = vld [vmem:[#allocation5 + $0x1c8] sm:$0xff]
    %v499 = vld [vmem:[#allocation5 + $0x1d0] sm:$0xff]
    %v500 = vld [vmem:[#allocation5 + $0x1d8] sm:$0xff]
    %v501 = vld [vmem:[#allocation5 + $0x1e0] sm:$0xff]
    %v502 = vld [vmem:[#allocation5 + $0x1e8] sm:$0xff]
    %v503 = vld [vmem:[#allocation5 + $0x1f0] sm:$0xff]
    %v504 = vld [vmem:[#allocation5 + $0x1f8] sm:$0xff]
    %v505 = vld [vmem:[#allocation5 + $0x200] sm:$0xff]
    %v506 = vld [vmem:[#allocation5 + $0x208] sm:$0xff]
    %v507 = vld [vmem:[#allocation5 + $0x210] sm:$0xff]
    %v508 = vld [vmem:[#allocation5 + $0x218] sm:$0xff]
    %v509 = vld [vmem:[#allocation5 + $0x220] sm:$0xff]
    %v510 = vld [vmem:[#allocation5 + $0x228] sm:$0xff]
    %v511 = vld [vmem:[#allocation5 + $0x230] sm:$0xff]
    %v512 = vld [vmem:[#allocation5 + $0x238] sm:$0xff]
    %v513 = vld [vmem:[#allocation5 + $0x240] sm:$0xff]
    %v514 = vld [vmem:[#allocation5 + $0x248] sm:$0xff]
    %v515 = vld [vmem:[#allocation5 + $0x250] sm:$0xff]
    %v516 = vld [vmem:[#allocation5 + $0x258] sm:$0xff]
    %v517 = vld [vmem:[#allocation5 + $0x260] sm:$0xff]
    %v518 = vld [vmem:[#allocation5 + $0x268] sm:$0xff]
    %v519 = vld [vmem:[#allocation5 + $0x270] sm:$0xff]
    %v520 = vld [vmem:[#allocation5 + $0x278] sm:$0xff]
    %v521 = vld [vmem:[#allocation5 + $0x280] sm:$0xff]
    %v522 = vld [vmem:[#allocation5 + $0x288] sm:$0xff]
    %v523 = vld [vmem:[#allocation5 + $0x290] sm:$0xff]
    %v524 = vld [vmem:[#allocation5 + $0x298] sm:$0xff]
    %v525 = vld [vmem:[#allocation5 + $0x2a0] sm:$0xff]
    %v526 = vld [vmem:[#allocation5 + $0x2a8] sm:$0xff]
    %v527 = vld [vmem:[#allocation5 + $0x2b0] sm:$0xff]
    %v528 = vld [vmem:[#allocation5 + $0x2b8] sm:$0xff]
    %v529 = vld [vmem:[#allocation5 + $0x2c0] sm:$0xff]
    %v530 = vld [vmem:[#allocation5 + $0x2c8] sm:$0xff]
    %v531 = vld [vmem:[#allocation5 + $0x2d0] sm:$0xff]
    %v532 = vld [vmem:[#allocation5 + $0x2d8] sm:$0xff]
    %v533 = vld [vmem:[#allocation5 + $0x2e0] sm:$0xff]
    %v534 = vld [vmem:[#allocation5 + $0x2e8] sm:$0xff]
    %v535 = vld [vmem:[#allocation5 + $0x2f0] sm:$0xff]
    %v536 = vld [vmem:[#allocation5 + $0x2f8] sm:$0xff]
    %v537 = vld [vmem:[#allocation5 + $0x300] sm:$0xff]
    %v538 = vld [vmem:[#allocation5 + $0x308] sm:$0xff]
    %v539 = vld [vmem:[#allocation5 + $0x310] sm:$0xff]
    %v540 = vld [vmem:[#allocation5 + $0x318] sm:$0xff]
    %v541 = vld [vmem:[#allocation5 + $0x320] sm:$0xff]
    %v542 = vld [vmem:[#allocation5 + $0x328] sm:$0xff]
    %v543 = vld [vmem:[#allocation5 + $0x330] sm:$0xff]
    %v544 = vld [vmem:[#allocation5 + $0x338] sm:$0xff]
    %v545 = vld [vmem:[#allocation5 + $0x340] sm:$0xff]
    %v546 = vld [vmem:[#allocation5 + $0x348] sm:$0xff]
    %v547 = vld [vmem:[#allocation5 + $0x350] sm:$0xff]
    %v548 = vld [vmem:[#allocation5 + $0x358] sm:$0xff]
    %v549 = vld [vmem:[#allocation5 + $0x360] sm:$0xff]
    %v550 = vld [vmem:[#allocation5 + $0x368] sm:$0xff]
    %v551 = vld [vmem:[#allocation5 + $0x370] sm:$0xff]
    %v552 = vld [vmem:[#allocation5 + $0x378] sm:$0xff]
    %v553 = vld [vmem:[#allocation5 + $0x380] sm:$0xff]
    %v554 = vld [vmem:[#allocation5 + $0x388] sm:$0xff]
    %v555 = vld [vmem:[#allocation5 + $0x390] sm:$0xff]
    %v556 = vld [vmem:[#allocation5 + $0x398] sm:$0xff]
    %v557 = vld [vmem:[#allocation5 + $0x3a0] sm:$0xff]
    %v558 = vld [vmem:[#allocation5 + $0x3a8] sm:$0xff]
    %v559 = vld [vmem:[#allocation5 + $0x3b0] sm:$0xff]
    %v560 = vld [vmem:[#allocation5 + $0x3b8] sm:$0xff]
    %v561 = vld [vmem:[#allocation5 + $0x3c0] sm:$0xff]
    %v562 = vld [vmem:[#allocation5 + $0x3c8] sm:$0xff]
    %v563 = vld [vmem:[#allocation5 + $0x3d0] sm:$0xff]
    %v564 = vld [vmem:[#allocation5 + $0x3d8] sm:$0xff]
    %v565 = vld [vmem:[#allocation5 + $0x3e0] sm:$0xff]
    %v566 = vld [vmem:[#allocation5 + $0x3e8] sm:$0xff]
    %v567 = vld [vmem:[#allocation5 + $0x3f0] sm:$0xff]
    %v568 = vld [vmem:[#allocation5 + $0x3f8] sm:$0xff]
    %v569 = vld [vmem:[#allocation5 + $0x400] sm:$0xff]
    %v570 = vld [vmem:[#allocation5 + $0x408] sm:$0xff]
    %v571 = vld [vmem:[#allocation5 + $0x410] sm:$0xff]
    %v572 = vld [vmem:[#allocation5 + $0x418] sm:$0xff]
    %v573 = vld [vmem:[#allocation5 + $0x420] sm:$0xff]
    %v574 = vld [vmem:[#allocation5 + $0x428] sm:$0xff]
    %v575 = vld [vmem:[#allocation5 + $0x430] sm:$0xff]
    %v576 = vld [vmem:[#allocation5 + $0x438] sm:$0xff]
    %v577 = vld [vmem:[#allocation5 + $0x440] sm:$0xff]
    %v578 = vld [vmem:[#allocation5 + $0x448] sm:$0xff]
    %v579 = vld [vmem:[#allocation5 + $0x450] sm:$0xff]
    %v580 = vld [vmem:[#allocation5 + $0x458] sm:$0xff]
    %v581 = vld [vmem:[#allocation5 + $0x460] sm:$0xff]
    %v582 = vld [vmem:[#allocation5 + $0x468] sm:$0xff]
    %v583 = vld [vmem:[#allocation5 + $0x470] sm:$0xff]
    %v584 = vld [vmem:[#allocation5 + $0x478] sm:$0xff]
    %v585 = vld [vmem:[#allocation5 + $0x480] sm:$0xff]
    %v586 = vld [vmem:[#allocation5 + $0x488] sm:$0xff]
    %v587 = vld [vmem:[#allocation5 + $0x490] sm:$0xff]
    %v588 = vld [vmem:[#allocation5 + $0x498] sm:$0xff]
    %v589 = vld [vmem:[#allocation5 + $0x4a0] sm:$0xff]
    %v590 = vld [vmem:[#allocation5 + $0x4a8] sm:$0xff]
    %v591 = vld [vmem:[#allocation5 + $0x4b0] sm:$0xff]
    %v592 = vld [vmem:[#allocation5 + $0x4b8] sm:$0xff]
    %v593 = vld [vmem:[#allocation5 + $0x4c0] sm:$0xff]
    %v594 = vld [vmem:[#allocation5 + $0x4c8] sm:$0xff]
    %v595 = vld [vmem:[#allocation5 + $0x4d0] sm:$0xff]
    %v596 = vld [vmem:[#allocation5 + $0x4d8] sm:$0xff]
    %v597 = vld [vmem:[#allocation5 + $0x4e0] sm:$0xff]
    %v598 = vld [vmem:[#allocation5 + $0x4e8] sm:$0xff]
    %v599 = vld [vmem:[#allocation5 + $0x4f0] sm:$0xff]
    %v600 = vld [vmem:[#allocation5 + $0x4f8] sm:$0xff]
    %v601 = vld [vmem:[#allocation5 + $0x500] sm:$0xff]
    %v602 = vld [vmem:[#allocation5 + $0x508] sm:$0xff]
    %v603 = vld [vmem:[#allocation5 + $0x510] sm:$0xff]
    %v604 = vld [vmem:[#allocation5 + $0x518] sm:$0xff]
    %v605 = vld [vmem:[#allocation5 + $0x520] sm:$0xff]
    %v606 = vld [vmem:[#allocation5 + $0x528] sm:$0xff]
    %v607 = vld [vmem:[#allocation5 + $0x530] sm:$0xff]
    %v608 = vld [vmem:[#allocation5 + $0x538] sm:$0xff]
    %v609 = vld [vmem:[#allocation5 + $0x540] sm:$0xff]
    %v610 = vld [vmem:[#allocation5 + $0x548] sm:$0xff]
    %v611 = vld [vmem:[#allocation5 + $0x550] sm:$0xff]
    %v612 = vld [vmem:[#allocation5 + $0x558] sm:$0xff]
    %v613 = vld [vmem:[#allocation5 + $0x560] sm:$0xff]
    %v614 = vld [vmem:[#allocation5 + $0x568] sm:$0xff]
    %v615 = vld [vmem:[#allocation5 + $0x570] sm:$0xff]
    %v616 = vld [vmem:[#allocation5 + $0x578] sm:$0xff]
    %v617 = vld [vmem:[#allocation5 + $0x580] sm:$0xff]
    %v618 = vld [vmem:[#allocation5 + $0x588] sm:$0xff]
    %v619 = vld [vmem:[#allocation5 + $0x590] sm:$0xff]
    %v620 = vld [vmem:[#allocation5 + $0x598] sm:$0xff]
    %v621 = vld [vmem:[#allocation5 + $0x5a0] sm:$0xff]
    %v622 = vld [vmem:[#allocation5 + $0x5a8] sm:$0xff]
    %v623 = vld [vmem:[#allocation5 + $0x5b0] sm:$0xff]
    %v624 = vld [vmem:[#allocation5 + $0x5b8] sm:$0xff]
    %v625 = vld [vmem:[#allocation5 + $0x5c0] sm:$0xff]
    %v626 = vld [vmem:[#allocation5 + $0x5c8] sm:$0xff]
    %v627 = vld [vmem:[#allocation5 + $0x5d0] sm:$0xff]
    %v628 = vld [vmem:[#allocation5 + $0x5d8] sm:$0xff]
    %v629 = vld [vmem:[#allocation5 + $0x5e0] sm:$0xff]
    %v630 = vld [vmem:[#allocation5 + $0x5e8] sm:$0xff]
    %v631 = vld [vmem:[#allocation5 + $0x5f0] sm:$0xff]
    %v632 = vld [vmem:[#allocation5 + $0x5f8] sm:$0xff]
    %v633 = vld [vmem:[#allocation5 + $0x600] sm:$0xff]
    %v634 = vld [vmem:[#allocation5 + $0x608] sm:$0xff]
    %v635 = vld [vmem:[#allocation5 + $0x610] sm:$0xff]
    %v636 = vld [vmem:[#allocation5 + $0x618] sm:$0xff]
    %v637 = vld [vmem:[#allocation5 + $0x620] sm:$0xff]
    %v638 = vld [vmem:[#allocation5 + $0x628] sm:$0xff]
    %v639 = vld [vmem:[#allocation5 + $0x630] sm:$0xff]
    %v640 = vld [vmem:[#allocation5 + $0x638] sm:$0xff]
    %v641 = vld [vmem:[#allocation5 + $0x640] sm:$0xff]
    %v642 = vld [vmem:[#allocation5 + $0x648] sm:$0xff]
    %v643 = vld [vmem:[#allocation5 + $0x650] sm:$0xff]
    %v644 = vld [vmem:[#allocation5 + $0x658] sm:$0xff]
    %v645 = vld [vmem:[#allocation5 + $0x660] sm:$0xff]
    %v646 = vld [vmem:[#allocation5 + $0x668] sm:$0xff]
    %v647 = vld [vmem:[#allocation5 + $0x670] sm:$0xff]
    %v648 = vld [vmem:[#allocation5 + $0x678] sm:$0xff]
    %v649 = vld [vmem:[#allocation5 + $0x680] sm:$0xff]
    %v650 = vld [vmem:[#allocation5 + $0x688] sm:$0xff]
    %v651 = vld [vmem:[#allocation5 + $0x690] sm:$0xff]
    %v652 = vld [vmem:[#allocation5 + $0x698] sm:$0xff]
    %v653 = vld [vmem:[#allocation5 + $0x6a0] sm:$0xff]
    %v654 = vld [vmem:[#allocation5 + $0x6a8] sm:$0xff]
    %v655 = vld [vmem:[#allocation5 + $0x6b0] sm:$0xff]
    %v656 = vld [vmem:[#allocation5 + $0x6b8] sm:$0xff]
    %v657 = vld [vmem:[#allocation5 + $0x6c0] sm:$0xff]
    %v658 = vld [vmem:[#allocation5 + $0x6c8] sm:$0xff]
    %v659 = vld [vmem:[#allocation5 + $0x6d0] sm:$0xff]
    %v660 = vld [vmem:[#allocation5 + $0x6d8] sm:$0xff]
    %v661 = vld [vmem:[#allocation5 + $0x6e0] sm:$0xff]
    %v662 = vld [vmem:[#allocation5 + $0x6e8] sm:$0xff]
    %v663 = vld [vmem:[#allocation5 + $0x6f0] sm:$0xff]
    %v664 = vld [vmem:[#allocation5 + $0x6f8] sm:$0xff]
    %v665 = vld [vmem:[#allocation5 + $0x700] sm:$0xff]
    %v666 = vld [vmem:[#allocation5 + $0x708] sm:$0xff]
    %v667 = vld [vmem:[#allocation5 + $0x710] sm:$0xff]
    %v668 = vld [vmem:[#allocation5 + $0x718] sm:$0xff]
    %v669 = vld [vmem:[#allocation5 + $0x720] sm:$0xff]
    %v670 = vld [vmem:[#allocation5 + $0x728] sm:$0xff]
    %v671 = vld [vmem:[#allocation5 + $0x730] sm:$0xff]
    %v672 = vld [vmem:[#allocation5 + $0x738] sm:$0xff]
    %v673 = vld [vmem:[#allocation5 + $0x740] sm:$0xff]
    %v674 = vld [vmem:[#allocation5 + $0x748] sm:$0xff]
    %v675 = vld [vmem:[#allocation5 + $0x750] sm:$0xff]
    %v676 = vld [vmem:[#allocation5 + $0x758] sm:$0xff]
    %v677 = vld [vmem:[#allocation5 + $0x760] sm:$0xff]
    %v678 = vld [vmem:[#allocation5 + $0x768] sm:$0xff]
    %v679 = vld [vmem:[#allocation5 + $0x770] sm:$0xff]
    %v680 = vld [vmem:[#allocation5 + $0x778] sm:$0xff]
    %v681 = vld [vmem:[#allocation5 + $0x780] sm:$0xff]
    %v682 = vld [vmem:[#allocation5 + $0x788] sm:$0xff]
    %v683 = vld [vmem:[#allocation5 + $0x790] sm:$0xff]
    %v684 = vld [vmem:[#allocation5 + $0x798] sm:$0xff]
    %v685 = vld [vmem:[#allocation5 + $0x7a0] sm:$0xff]
    %v686 = vld [vmem:[#allocation5 + $0x7a8] sm:$0xff]
    %v687 = vld [vmem:[#allocation5 + $0x7b0] sm:$0xff]
    %v688 = vld [vmem:[#allocation5 + $0x7b8] sm:$0xff]
    %v689 = vld [vmem:[#allocation5 + $0x7c0] sm:$0xff]
    %v690 = vld [vmem:[#allocation5 + $0x7c8] sm:$0xff]
    %v691 = vld [vmem:[#allocation5 + $0x7d0] sm:$0xff]
    %v692 = vld [vmem:[#allocation5 + $0x7d8] sm:$0xff]
    %v693 = vld [vmem:[#allocation5 + $0x7e0] sm:$0xff]
    %v694 = vld [vmem:[#allocation5 + $0x7e8] sm:$0xff]
    %v695 = vld [vmem:[#allocation5 + $0x7f0] sm:$0xff]
    %v696 = vld [vmem:[#allocation5 + $0x7f8] sm:$0xff]
    %v697 = vld [vmem:[#allocation5 + $0x800] sm:$0xff]
    %v698 = vld [vmem:[#allocation5 + $0x808] sm:$0xff]
    %v699 = vld [vmem:[#allocation5 + $0x810] sm:$0xff]
    %v700 = vld [vmem:[#allocation5 + $0x818] sm:$0xff]
    %v701 = vld [vmem:[#allocation5 + $0x820] sm:$0xff]
    %v702 = vld [vmem:[#allocation5 + $0x828] sm:$0xff]
    %v703 = vld [vmem:[#allocation5 + $0x830] sm:$0xff]
    %v704 = vld [vmem:[#allocation5 + $0x838] sm:$0xff]
    %v705 = vld [vmem:[#allocation5 + $0x840] sm:$0xff]
    %v706 = vld [vmem:[#allocation5 + $0x848] sm:$0xff]
    %v707 = vld [vmem:[#allocation5 + $0x850] sm:$0xff]
    %v708 = vld [vmem:[#allocation5 + $0x858] sm:$0xff]
    %v709 = vld [vmem:[#allocation5 + $0x860] sm:$0xff]
    %v710 = vld [vmem:[#allocation5 + $0x868] sm:$0xff]
    %v711 = vld [vmem:[#allocation5 + $0x870] sm:$0xff]
    %v712 = vld [vmem:[#allocation5 + $0x878] sm:$0xff]
    %v713 = vld [vmem:[#allocation5 + $0x880] sm:$0xff]
    %v714 = vld [vmem:[#allocation5 + $0x888] sm:$0xff]
    %v715 = vld [vmem:[#allocation5 + $0x890] sm:$0xff]
    %v716 = vld [vmem:[#allocation5 + $0x898] sm:$0xff]
    %v717 = vld [vmem:[#allocation5 + $0x8a0] sm:$0xff]
    %v718 = vld [vmem:[#allocation5 + $0x8a8] sm:$0xff]
    %v719 = vld [vmem:[#allocation5 + $0x8b0] sm:$0xff]
    %v720 = vld [vmem:[#allocation5 + $0x8b8] sm:$0xff]
    %v721 = vld [vmem:[#allocation5 + $0x8c0] sm:$0xff]
    %v722 = vld [vmem:[#allocation5 + $0x8c8] sm:$0xff]
    %v723 = vld [vmem:[#allocation5 + $0x8d0] sm:$0xff]
    %v724 = vld [vmem:[#allocation5 + $0x8d8] sm:$0xff]
    %v725 = vld [vmem:[#allocation5 + $0x8e0] sm:$0xff]
    %v726 = vld [vmem:[#allocation5 + $0x8e8] sm:$0xff]
    %v727 = vld [vmem:[#allocation5 + $0x8f0] sm:$0xff]
    %v728 = vld [vmem:[#allocation5 + $0x8f8] sm:$0xff]
    %v729 = vld [vmem:[#allocation5 + $0x900] sm:$0xff]
    %v730 = vld [vmem:[#allocation5 + $0x908] sm:$0xff]
    %v731 = vld [vmem:[#allocation5 + $0x910] sm:$0xff]
    %v732 = vld [vmem:[#allocation5 + $0x918] sm:$0xff]
    %v733 = vld [vmem:[#allocation5 + $0x920] sm:$0xff]
    %v734 = vld [vmem:[#allocation5 + $0x928] sm:$0xff]
    %v735 = vld [vmem:[#allocation5 + $0x930] sm:$0xff]
    %v736 = vld [vmem:[#allocation5 + $0x938] sm:$0xff]
    %v737 = vld [vmem:[#allocation5 + $0x940] sm:$0xff]
    %v738 = vld [vmem:[#allocation5 + $0x948] sm:$0xff]
    %v739 = vld [vmem:[#allocation5 + $0x950] sm:$0xff]
    %v740 = vld [vmem:[#allocation5 + $0x958] sm:$0xff]
    %v741 = vld [vmem:[#allocation5 + $0x960] sm:$0xff]
    %v742 = vld [vmem:[#allocation5 + $0x968] sm:$0xff]
    %v743 = vld [vmem:[#allocation5 + $0x970] sm:$0xff]
    %v744 = vld [vmem:[#allocation5 + $0x978] sm:$0xff]
    %v745 = vld [vmem:[#allocation5 + $0x980] sm:$0xff]
    %v746 = vld [vmem:[#allocation5 + $0x988] sm:$0xff]
    %v747 = vld [vmem:[#allocation5 + $0x990] sm:$0xff]
    %v748 = vld [vmem:[#allocation5 + $0x998] sm:$0xff]
    %v749 = vld [vmem:[#allocation5 + $0x9a0] sm:$0xff]
    %v750 = vld [vmem:[#allocation5 + $0x9a8] sm:$0xff]
    %v751 = vld [vmem:[#allocation5 + $0x9b0] sm:$0xff]
    %v752 = vld [vmem:[#allocation5 + $0x9b8] sm:$0xff]
    %v753 = vld [vmem:[#allocation5 + $0x9c0] sm:$0xff]
    %v754 = vld [vmem:[#allocation5 + $0x9c8] sm:$0xff]
    %v755 = vld [vmem:[#allocation5 + $0x9d0] sm:$0xff]
    %v756 = vld [vmem:[#allocation5 + $0x9d8] sm:$0xff]
    %v757 = vld [vmem:[#allocation5 + $0x9e0] sm:$0xff]
    %v758 = vld [vmem:[#allocation5 + $0x9e8] sm:$0xff]
    %v759 = vld [vmem:[#allocation5 + $0x9f0] sm:$0xff]
    %v760 = vld [vmem:[#allocation5 + $0x9f8] sm:$0xff]
    %v761 = vld [vmem:[#allocation5 + $0xa00] sm:$0xff]
    %v762 = vld [vmem:[#allocation5 + $0xa08] sm:$0xff]
    %v763 = vld [vmem:[#allocation5 + $0xa10] sm:$0xff]
    %v764 = vld [vmem:[#allocation5 + $0xa18] sm:$0xff]
    %v765 = vld [vmem:[#allocation5 + $0xa20] sm:$0xff]
    %v766 = vld [vmem:[#allocation5 + $0xa28] sm:$0xff]
    %v767 = vld [vmem:[#allocation5 + $0xa30] sm:$0xff]
    %v768 = vld [vmem:[#allocation5 + $0xa38] sm:$0xff]
    %v769 = vld [vmem:[#allocation5 + $0xa40] sm:$0xff]
    %v770 = vld [vmem:[#allocation5 + $0xa48] sm:$0xff]
    %v771 = vld [vmem:[#allocation5 + $0xa50] sm:$0xff]
    %v772 = vld [vmem:[#allocation5 + $0xa58] sm:$0xff]
    %v773 = vld [vmem:[#allocation5 + $0xa60] sm:$0xff]
    %v774 = vld [vmem:[#allocation5 + $0xa68] sm:$0xff]
    %v775 = vld [vmem:[#allocation5 + $0xa70] sm:$0xff]
    %v776 = vld [vmem:[#allocation5 + $0xa78] sm:$0xff]
    %v777 = vld [vmem:[#allocation5 + $0xa80] sm:$0xff]
    %v778 = vld [vmem:[#allocation5 + $0xa88] sm:$0xff]
    %v779 = vld [vmem:[#allocation5 + $0xa90] sm:$0xff]
    %v780 = vld [vmem:[#allocation5 + $0xa98] sm:$0xff]
    %v781 = vld [vmem:[#allocation5 + $0xaa0] sm:$0xff]
    %v782 = vld [vmem:[#allocation5 + $0xaa8] sm:$0xff]
    %v783 = vld [vmem:[#allocation5 + $0xab0] sm:$0xff]
    %v784 = vld [vmem:[#allocation5 + $0xab8] sm:$0xff]
    %v785 = vld [vmem:[#allocation5 + $0xac0] sm:$0xff]
    %v786 = vld [vmem:[#allocation5 + $0xac8] sm:$0xff]
    %v787 = vld [vmem:[#allocation5 + $0xad0] sm:$0xff]
    %v788 = vld [vmem:[#allocation5 + $0xad8] sm:$0xff]
    %v789 = vld [vmem:[#allocation5 + $0xae0] sm:$0xff]
    %v790 = vld [vmem:[#allocation5 + $0xae8] sm:$0xff]
    %v791 = vld [vmem:[#allocation5 + $0xaf0] sm:$0xff]
    %v792 = vld [vmem:[#allocation5 + $0xaf8] sm:$0xff]
    %v793 = vld [vmem:[#allocation5 + $0xb00] sm:$0xff]
    %v794 = vld [vmem:[#allocation5 + $0xb08] sm:$0xff]
    %v795 = vld [vmem:[#allocation5 + $0xb10] sm:$0xff]
    %v796 = vld [vmem:[#allocation5 + $0xb18] sm:$0xff]
    %v797 = vld [vmem:[#allocation5 + $0xb20] sm:$0xff]
    %v798 = vld [vmem:[#allocation5 + $0xb28] sm:$0xff]
    %v799 = vld [vmem:[#allocation5 + $0xb30] sm:$0xff]
    %v800 = vld [vmem:[#allocation5 + $0xb38] sm:$0xff]
    %v801 = vld [vmem:[#allocation5 + $0xb40] sm:$0xff]
    %v802 = vld [vmem:[#allocation5 + $0xb48] sm:$0xff]
    %v803 = vld [vmem:[#allocation5 + $0xb50] sm:$0xff]
    %v804 = vld [vmem:[#allocation5 + $0xb58] sm:$0xff]
    %v805 = vld [vmem:[#allocation5 + $0xb60] sm:$0xff]
    %v806 = vld [vmem:[#allocation5 + $0xb68] sm:$0xff]
    %v807 = vld [vmem:[#allocation5 + $0xb70] sm:$0xff]
    %v808 = vld [vmem:[#allocation5 + $0xb78] sm:$0xff]
    %v809 = vld [vmem:[#allocation5 + $0xb80] sm:$0xff]
    %v810 = vld [vmem:[#allocation5 + $0xb88] sm:$0xff]
    %v811 = vld [vmem:[#allocation5 + $0xb90] sm:$0xff]
    %v812 = vld [vmem:[#allocation5 + $0xb98] sm:$0xff]
    %v813 = vld [vmem:[#allocation5 + $0xba0] sm:$0xff]
    %v814 = vld [vmem:[#allocation5 + $0xba8] sm:$0xff]
    %v815 = vld [vmem:[#allocation5 + $0xbb0] sm:$0xff]
    %v816 = vld [vmem:[#allocation5 + $0xbb8] sm:$0xff]
    %v817 = vld [vmem:[#allocation5 + $0xbc0] sm:$0xff]
    %v818 = vld [vmem:[#allocation5 + $0xbc8] sm:$0xff]
    %v819 = vld [vmem:[#allocation5 + $0xbd0] sm:$0xff]
    %v820 = vld [vmem:[#allocation5 + $0xbd8] sm:$0xff]
    %v821 = vld [vmem:[#allocation5 + $0xbe0] sm:$0xff]
    %v822 = vld [vmem:[#allocation5 + $0xbe8] sm:$0xff]
    %v823 = vld [vmem:[#allocation5 + $0xbf0] sm:$0xff]
    %v824 = vld [vmem:[#allocation5 + $0xbf8] sm:$0xff]
    %v825 = vsub.f32 %v57, %v441
    %v826 = vsub.f32 %v58, %v442
    %v827 = vsub.f32 %v59, %v443
    %v828 = vsub.f32 %v60, %v444
    %v829 = vsub.f32 %v61, %v445
    %v830 = vsub.f32 %v62, %v446
    %v831 = vsub.f32 %v63, %v447
    %v832 = vsub.f32 %v64, %v448
    %v833 = vsub.f32 %v65, %v449
    %v834 = vsub.f32 %v66, %v450
    %v835 = vsub.f32 %v67, %v451
    %v836 = vsub.f32 %v68, %v452
    %v837 = vsub.f32 %v69, %v453
    %v838 = vsub.f32 %v70, %v454
    %v839 = vsub.f32 %v71, %v455
    %v840 = vsub.f32 %v72, %v456
    %v841 = vsub.f32 %v73, %v457
    %v842 = vsub.f32 %v74, %v458
    %v843 = vsub.f32 %v75, %v459
    %v844 = vsub.f32 %v76, %v460
    %v845 = vsub.f32 %v77, %v461
    %v846 = vsub.f32 %v78, %v462
    %v847 = vsub.f32 %v79, %v463
    %v848 = vsub.f32 %v80, %v464
    %v849 = vsub.f32 %v81, %v465
    %v850 = vsub.f32 %v82, %v466
    %v851 = vsub.f32 %v83, %v467
    %v852 = vsub.f32 %v84, %v468
    %v853 = vsub.f32 %v85, %v469
    %v854 = vsub.f32 %v86, %v470
    %v855 = vsub.f32 %v87, %v471
    %v856 = vsub.f32 %v88, %v472
    %v857 = vsub.f32 %v89, %v473
    %v858 = vsub.f32 %v90, %v474
    %v859 = vsub.f32 %v91, %v475
    %v860 = vsub.f32 %v92, %v476
    %v861 = vsub.f32 %v93, %v477
    %v862 = vsub.f32 %v94, %v478
    %v863 = vsub.f32 %v95, %v479
    %v864 = vsub.f32 %v96, %v480
    %v865 = vsub.f32 %v97, %v481
    %v866 = vsub.f32 %v98, %v482
    %v867 = vsub.f32 %v99, %v483
    %v868 = vsub.f32 %v100, %v484
    %v869 = vsub.f32 %v101, %v485
    %v870 = vsub.f32 %v102, %v486
    %v871 = vsub.f32 %v103, %v487
    %v872 = vsub.f32 %v104, %v488
    %v873 = vsub.f32 %v105, %v489
    %v874 = vsub.f32 %v106, %v490
    %v875 = vsub.f32 %v107, %v491
    %v876 = vsub.f32 %v108, %v492
    %v877 = vsub.f32 %v109, %v493
    %v878 = vsub.f32 %v110, %v494
    %v879 = vsub.f32 %v111, %v495
    %v880 = vsub.f32 %v112, %v496
    %v881 = vsub.f32 %v113, %v497
    %v882 = vsub.f32 %v114, %v498
    %v883 = vsub.f32 %v115, %v499
    %v884 = vsub.f32 %v116, %v500
    %v885 = vsub.f32 %v117, %v501
    %v886 = vsub.f32 %v118, %v502
    %v887 = vsub.f32 %v119, %v503
    %v888 = vsub.f32 %v120, %v504
    %v889 = vsub.f32 %v121, %v505
    %v890 = vsub.f32 %v122, %v506
    %v891 = vsub.f32 %v123, %v507
    %v892 = vsub.f32 %v124, %v508
    %v893 = vsub.f32 %v125, %v509
    %v894 = vsub.f32 %v126, %v510
    %v895 = vsub.f32 %v127, %v511
    %v896 = vsub.f32 %v128, %v512
    %v897 = vsub.f32 %v129, %v513
    %v898 = vsub.f32 %v130, %v514
    %v899 = vsub.f32 %v131, %v515
    %v900 = vsub.f32 %v132, %v516
    %v901 = vsub.f32 %v133, %v517
    %v902 = vsub.f32 %v134, %v518
    %v903 = vsub.f32 %v135, %v519
    %v904 = vsub.f32 %v136, %v520
    %v905 = vsub.f32 %v137, %v521
    %v906 = vsub.f32 %v138, %v522
    %v907 = vsub.f32 %v139, %v523
    %v908 = vsub.f32 %v140, %v524
    %v909 = vsub.f32 %v141, %v525
    %v910 = vsub.f32 %v142, %v526
    %v911 = vsub.f32 %v143, %v527
    %v912 = vsub.f32 %v144, %v528
    %v913 = vsub.f32 %v145, %v529
    %v914 = vsub.f32 %v146, %v530
    %v915 = vsub.f32 %v147, %v531
    %v916 = vsub.f32 %v148, %v532
    %v917 = vsub.f32 %v149, %v533
    %v918 = vsub.f32 %v150, %v534
    %v919 = vsub.f32 %v151, %v535
    %v920 = vsub.f32 %v152, %v536
    %v921 = vsub.f32 %v153, %v537
    %v922 = vsub.f32 %v154, %v538
    %v923 = vsub.f32 %v155, %v539
    %v924 = vsub.f32 %v156, %v540
    %v925 = vsub.f32 %v157, %v541
    %v926 = vsub.f32 %v158, %v542
    %v927 = vsub.f32 %v159, %v543
    %v928 = vsub.f32 %v160, %v544
    %v929 = vsub.f32 %v161, %v545
    %v930 = vsub.f32 %v162, %v546
    %v931 = vsub.f32 %v163, %v547
    %v932 = vsub.f32 %v164, %v548
    %v933 = vsub.f32 %v165, %v549
    %v934 = vsub.f32 %v166, %v550
    %v935 = vsub.f32 %v167, %v551
    %v936 = vsub.f32 %v168, %v552
    %v937 = vsub.f32 %v169, %v553
    %v938 = vsub.f32 %v170, %v554
    %v939 = vsub.f32 %v171, %v555
    %v940 = vsub.f32 %v172, %v556
    %v941 = vsub.f32 %v173, %v557
    %v942 = vsub.f32 %v174, %v558
    %v943 = vsub.f32 %v175, %v559
    %v944 = vsub.f32 %v176, %v560
    %v945 = vsub.f32 %v177, %v561
    %v946 = vsub.f32 %v178, %v562
    %v947 = vsub.f32 %v179, %v563
    %v948 = vsub.f32 %v180, %v564
    %v949 = vsub.f32 %v181, %v565
    %v950 = vsub.f32 %v182, %v566
    %v951 = vsub.f32 %v183, %v567
    %v952 = vsub.f32 %v184, %v568
    %v953 = vsub.f32 %v185, %v569
    %v954 = vsub.f32 %v186, %v570
    %v955 = vsub.f32 %v187, %v571
    %v956 = vsub.f32 %v188, %v572
    %v957 = vsub.f32 %v189, %v573
    %v958 = vsub.f32 %v190, %v574
    %v959 = vsub.f32 %v191, %v575
    %v960 = vsub.f32 %v192, %v576
    %v961 = vsub.f32 %v193, %v577
    %v962 = vsub.f32 %v194, %v578
    %v963 = vsub.f32 %v195, %v579
    %v964 = vsub.f32 %v196, %v580
    %v965 = vsub.f32 %v197, %v581
    %v966 = vsub.f32 %v198, %v582
    %v967 = vsub.f32 %v199, %v583
    %v968 = vsub.f32 %v200, %v584
    %v969 = vsub.f32 %v201, %v585
    %v970 = vsub.f32 %v202, %v586
    %v971 = vsub.f32 %v203, %v587
    %v972 = vsub.f32 %v204, %v588
    %v973 = vsub.f32 %v205, %v589
    %v974 = vsub.f32 %v206, %v590
    %v975 = vsub.f32 %v207, %v591
    %v976 = vsub.f32 %v208, %v592
    %v977 = vsub.f32 %v209, %v593
    %v978 = vsub.f32 %v210, %v594
    %v979 = vsub.f32 %v211, %v595
    %v980 = vsub.f32 %v212, %v596
    %v981 = vsub.f32 %v213, %v597
    %v982 = vsub.f32 %v214, %v598
    %v983 = vsub.f32 %v215, %v599
    %v984 = vsub.f32 %v216, %v600
    %v985 = vsub.f32 %v217, %v601
    %v986 = vsub.f32 %v218, %v602
    %v987 = vsub.f32 %v219, %v603
    %v988 = vsub.f32 %v220, %v604
    %v989 = vsub.f32 %v221, %v605
    %v990 = vsub.f32 %v222, %v606
    %v991 = vsub.f32 %v223, %v607
    %v992 = vsub.f32 %v224, %v608
    %v993 = vsub.f32 %v225, %v609
    %v994 = vsub.f32 %v226, %v610
    %v995 = vsub.f32 %v227, %v611
    %v996 = vsub.f32 %v228, %v612
    %v997 = vsub.f32 %v229, %v613
    %v998 = vsub.f32 %v230, %v614
    %v999 = vsub.f32 %v231, %v615
    %v1000 = vsub.f32 %v232, %v616
    %v1001 = vsub.f32 %v233, %v617
    %v1002 = vsub.f32 %v234, %v618
    %v1003 = vsub.f32 %v235, %v619
    %v1004 = vsub.f32 %v236, %v620
    %v1005 = vsub.f32 %v237, %v621
    %v1006 = vsub.f32 %v238, %v622
    %v1007 = vsub.f32 %v239, %v623
    %v1008 = vsub.f32 %v240, %v624
    %v1009 = vsub.f32 %v241, %v625
    %v1010 = vsub.f32 %v242, %v626
    %v1011 = vsub.f32 %v243, %v627
    %v1012 = vsub.f32 %v244, %v628
    %v1013 = vsub.f32 %v245, %v629
    %v1014 = vsub.f32 %v246, %v630
    %v1015 = vsub.f32 %v247, %v631
    %v1016 = vsub.f32 %v248, %v632
    %v1017 = vsub.f32 %v249, %v633
    %v1018 = vsub.f32 %v250, %v634
    %v1019 = vsub.f32 %v251, %v635
    %v1020 = vsub.f32 %v252, %v636
    %v1021 = vsub.f32 %v253, %v637
    %v1022 = vsub.f32 %v254, %v638
    %v1023 = vsub.f32 %v255, %v639
    %v1024 = vsub.f32 %v256, %v640
    %v1025 = vsub.f32 %v257, %v641
    %v1026 = vsub.f32 %v258, %v642
    %v1027 = vsub.f32 %v259, %v643
    %v1028 = vsub.f32 %v260, %v644
    %v1029 = vsub.f32 %v261, %v645
    %v1030 = vsub.f32 %v262, %v646
    %v1031 = vsub.f32 %v263, %v647
    %v1032 = vsub.f32 %v264, %v648
    %v1033 = vsub.f32 %v265, %v649
    %v1034 = vsub.f32 %v266, %v650
    %v1035 = vsub.f32 %v267, %v651
    %v1036 = vsub.f32 %v268, %v652
    %v1037 = vsub.f32 %v269, %v653
    %v1038 = vsub.f32 %v270, %v654
    %v1039 = vsub.f32 %v271, %v655
    %v1040 = vsub.f32 %v272, %v656
    %v1041 = vsub.f32 %v273, %v657
    %v1042 = vsub.f32 %v274, %v658
    %v1043 = vsub.f32 %v275, %v659
    %v1044 = vsub.f32 %v276, %v660
    %v1045 = vsub.f32 %v277, %v661
    %v1046 = vsub.f32 %v278, %v662
    %v1047 = vsub.f32 %v279, %v663
    %v1048 = vsub.f32 %v280, %v664
    %v1049 = vsub.f32 %v281, %v665
    %v1050 = vsub.f32 %v282, %v666
    %v1051 = vsub.f32 %v283, %v667
    %v1052 = vsub.f32 %v284, %v668
    %v1053 = vsub.f32 %v285, %v669
    %v1054 = vsub.f32 %v286, %v670
    %v1055 = vsub.f32 %v287, %v671
    %v1056 = vsub.f32 %v288, %v672
    %v1057 = vsub.f32 %v289, %v673
    %v1058 = vsub.f32 %v290, %v674
    %v1059 = vsub.f32 %v291, %v675
    %v1060 = vsub.f32 %v292, %v676
    %v1061 = vsub.f32 %v293, %v677
    %v1062 = vsub.f32 %v294, %v678
    %v1063 = vsub.f32 %v295, %v679
    %v1064 = vsub.f32 %v296, %v680
    %v1065 = vsub.f32 %v297, %v681
    %v1066 = vsub.f32 %v298, %v682
    %v1067 = vsub.f32 %v299, %v683
    %v1068 = vsub.f32 %v300, %v684
    %v1069 = vsub.f32 %v301, %v685
    %v1070 = vsub.f32 %v302, %v686
    %v1071 = vsub.f32 %v303, %v687
    %v1072 = vsub.f32 %v304, %v688
    %v1073 = vsub.f32 %v305, %v689
    %v1074 = vsub.f32 %v306, %v690
    %v1075 = vsub.f32 %v307, %v691
    %v1076 = vsub.f32 %v308, %v692
    %v1077 = vsub.f32 %v309, %v693
    %v1078 = vsub.f32 %v310, %v694
    %v1079 = vsub.f32 %v311, %v695
    %v1080 = vsub.f32 %v312, %v696
    %v1081 = vsub.f32 %v313, %v697
    %v1082 = vsub.f32 %v314, %v698
    %v1083 = vsub.f32 %v315, %v699
    %v1084 = vsub.f32 %v316, %v700
    %v1085 = vsub.f32 %v317, %v701
    %v1086 = vsub.f32 %v318, %v702
    %v1087 = vsub.f32 %v319, %v703
    %v1088 = vsub.f32 %v320, %v704
    %v1089 = vsub.f32 %v321, %v705
    %v1090 = vsub.f32 %v322, %v706
    %v1091 = vsub.f32 %v323, %v707
    %v1092 = vsub.f32 %v324, %v708
    %v1093 = vsub.f32 %v325, %v709
    %v1094 = vsub.f32 %v326, %v710
    %v1095 = vsub.f32 %v327, %v711
    %v1096 = vsub.f32 %v328, %v712
    %v1097 = vsub.f32 %v329, %v713
    %v1098 = vsub.f32 %v330, %v714
    %v1099 = vsub.f32 %v331, %v715
    %v1100 = vsub.f32 %v332, %v716
    %v1101 = vsub.f32 %v333, %v717
    %v1102 = vsub.f32 %v334, %v718
    %v1103 = vsub.f32 %v335, %v719
    %v1104 = vsub.f32 %v336, %v720
    %v1105 = vsub.f32 %v337, %v721
    %v1106 = vsub.f32 %v338, %v722
    %v1107 = vsub.f32 %v339, %v723
    %v1108 = vsub.f32 %v340, %v724
    %v1109 = vsub.f32 %v341, %v725
    %v1110 = vsub.f32 %v342, %v726
    %v1111 = vsub.f32 %v343, %v727
    %v1112 = vsub.f32 %v344, %v728
    %v1113 = vsub.f32 %v345, %v729
    %v1114 = vsub.f32 %v346, %v730
    %v1115 = vsub.f32 %v347, %v731
    %v1116 = vsub.f32 %v348, %v732
    %v1117 = vsub.f32 %v349, %v733
    %v1118 = vsub.f32 %v350, %v734
    %v1119 = vsub.f32 %v351, %v735
    %v1120 = vsub.f32 %v352, %v736
    %v1121 = vsub.f32 %v353, %v737
    %v1122 = vsub.f32 %v354, %v738
    %v1123 = vsub.f32 %v355, %v739
    %v1124 = vsub.f32 %v356, %v740
    %v1125 = vsub.f32 %v357, %v741
    %v1126 = vsub.f32 %v358, %v742
    %v1127 = vsub.f32 %v359, %v743
    %v1128 = vsub.f32 %v360, %v744
    %v1129 = vsub.f32 %v361, %v745
    %v1130 = vsub.f32 %v362, %v746
    %v1131 = vsub.f32 %v363, %v747
    %v1132 = vsub.f32 %v364, %v748
    %v1133 = vsub.f32 %v365, %v749
    %v1134 = vsub.f32 %v366, %v750
    %v1135 = vsub.f32 %v367, %v751
    %v1136 = vsub.f32 %v368, %v752
    %v1137 = vsub.f32 %v369, %v753
    %v1138 = vsub.f32 %v370, %v754
    %v1139 = vsub.f32 %v371, %v755
    %v1140 = vsub.f32 %v372, %v756
    %v1141 = vsub.f32 %v373, %v757
    %v1142 = vsub.f32 %v374, %v758
    %v1143 = vsub.f32 %v375, %v759
    %v1144 = vsub.f32 %v376, %v760
    %v1145 = vsub.f32 %v377, %v761
    %v1146 = vsub.f32 %v378, %v762
    %v1147 = vsub.f32 %v379, %v763
    %v1148 = vsub.f32 %v380, %v764
    %v1149 = vsub.f32 %v381, %v765
    %v1150 = vsub.f32 %v382, %v766
    %v1151 = vsub.f32 %v383, %v767
    %v1152 = vsub.f32 %v384, %v768
    %v1153 = vsub.f32 %v385, %v769
    %v1154 = vsub.f32 %v386, %v770
    %v1155 = vsub.f32 %v387, %v771
    %v1156 = vsub.f32 %v388, %v772
    %v1157 = vsub.f32 %v389, %v773
    %v1158 = vsub.f32 %v390, %v774
    %v1159 = vsub.f32 %v391, %v775
    %v1160 = vsub.f32 %v392, %v776
    %v1161 = vsub.f32 %v393, %v777
    %v1162 = vsub.f32 %v394, %v778
    %v1163 = vsub.f32 %v395, %v779
    %v1164 = vsub.f32 %v396, %v780
    %v1165 = vsub.f32 %v397, %v781
    %v1166 = vsub.f32 %v398, %v782
    %v1167 = vsub.f32 %v399, %v783
    %v1168 = vsub.f32 %v400, %v784
    %v1169 = vsub.f32 %v401, %v785
    %v1170 = vsub.f32 %v402, %v786
    %v1171 = vsub.f32 %v403, %v787
    %v1172 = vsub.f32 %v404, %v788
    %v1173 = vsub.f32 %v405, %v789
    %v1174 = vsub.f32 %v406, %v790
    %v1175 = vsub.f32 %v407, %v791
    %v1176 = vsub.f32 %v408, %v792
    %v1177 = vsub.f32 %v409, %v793
    %v1178 = vsub.f32 %v410, %v794
    %v1179 = vsub.f32 %v411, %v795
    %v1180 = vsub.f32 %v412, %v796
    %v1181 = vsub.f32 %v413, %v797
    %v1182 = vsub.f32 %v414, %v798
    %v1183 = vsub.f32 %v415, %v799
    %v1184 = vsub.f32 %v416, %v800
    %v1185 = vsub.f32 %v417, %v801
    %v1186 = vsub.f32 %v418, %v802
    %v1187 = vsub.f32 %v419, %v803
    %v1188 = vsub.f32 %v420, %v804
    %v1189 = vsub.f32 %v421, %v805
    %v1190 = vsub.f32 %v422, %v806
    %v1191 = vsub.f32 %v423, %v807
    %v1192 = vsub.f32 %v424, %v808
    %v1193 = vsub.f32 %v425, %v809
    %v1194 = vsub.f32 %v426, %v810
    %v1195 = vsub.f32 %v427, %v811
    %v1196 = vsub.f32 %v428, %v812
    %v1197 = vsub.f32 %v429, %v813
    %v1198 = vsub.f32 %v430, %v814
    %v1199 = vsub.f32 %v431, %v815
    %v1200 = vsub.f32 %v432, %v816
    %v1201 = vsub.f32 %v433, %v817
    %v1202 = vsub.f32 %v434, %v818
    %v1203 = vsub.f32 %v435, %v819
    %v1204 = vsub.f32 %v436, %v820
    %v1205 = vsub.f32 %v437, %v821
    %v1206 = vsub.f32 %v438, %v822
    %v1207 = vsub.f32 %v439, %v823
    %v1208 = vsub.f32 %v440, %v824
    %v1209 = vmul.f32 %v825, %v825
    %v1210 = vmul.f32 %v826, %v826
    %v1211 = vmul.f32 %v827, %v827
    %v1212 = vmul.f32 %v828, %v828
    %v1213 = vmul.f32 %v829, %v829
    %v1214 = vmul.f32 %v830, %v830
    %v1215 = vmul.f32 %v831, %v831
    %v1216 = vmul.f32 %v832, %v832
    %v1217 = vmul.f32 %v833, %v833
    %v1218 = vmul.f32 %v834, %v834
    %v1219 = vmul.f32 %v835, %v835
    %v1220 = vmul.f32 %v836, %v836
    %v1221 = vmul.f32 %v837, %v837
    %v1222 = vmul.f32 %v838, %v838
    %v1223 = vmul.f32 %v839, %v839
    %v1224 = vmul.f32 %v840, %v840
    %v1225 = vmul.f32 %v841, %v841
    %v1226 = vmul.f32 %v842, %v842
    %v1227 = vmul.f32 %v843, %v843
    %v1228 = vmul.f32 %v844, %v844
    %v1229 = vmul.f32 %v845, %v845
    %v1230 = vmul.f32 %v846, %v846
    %v1231 = vmul.f32 %v847, %v847
    %v1232 = vmul.f32 %v848, %v848
    %v1233 = vmul.f32 %v849, %v849
    %v1234 = vmul.f32 %v850, %v850
    %v1235 = vmul.f32 %v851, %v851
    %v1236 = vmul.f32 %v852, %v852
    %v1237 = vmul.f32 %v853, %v853
    %v1238 = vmul.f32 %v854, %v854
    %v1239 = vmul.f32 %v855, %v855
    %v1240 = vmul.f32 %v856, %v856
    %v1241 = vmul.f32 %v857, %v857
    %v1242 = vmul.f32 %v858, %v858
    %v1243 = vmul.f32 %v859, %v859
    %v1244 = vmul.f32 %v860, %v860
    %v1245 = vmul.f32 %v861, %v861
    %v1246 = vmul.f32 %v862, %v862
    %v1247 = vmul.f32 %v863, %v863
    %v1248 = vmul.f32 %v864, %v864
    %v1249 = vmul.f32 %v865, %v865
    %v1250 = vmul.f32 %v866, %v866
    %v1251 = vmul.f32 %v867, %v867
    %v1252 = vmul.f32 %v868, %v868
    %v1253 = vmul.f32 %v869, %v869
    %v1254 = vmul.f32 %v870, %v870
    %v1255 = vmul.f32 %v871, %v871
    %v1256 = vmul.f32 %v872, %v872
    %v1257 = vmul.f32 %v873, %v873
    %v1258 = vmul.f32 %v874, %v874
    %v1259 = vmul.f32 %v875, %v875
    %v1260 = vmul.f32 %v876, %v876
    %v1261 = vmul.f32 %v877, %v877
    %v1262 = vmul.f32 %v878, %v878
    %v1263 = vmul.f32 %v879, %v879
    %v1264 = vmul.f32 %v880, %v880
    %v1265 = vmul.f32 %v881, %v881
    %v1266 = vmul.f32 %v882, %v882
    %v1267 = vmul.f32 %v883, %v883
    %v1268 = vmul.f32 %v884, %v884
    %v1269 = vmul.f32 %v885, %v885
    %v1270 = vmul.f32 %v886, %v886
    %v1271 = vmul.f32 %v887, %v887
    %v1272 = vmul.f32 %v888, %v888
    %v1273 = vmul.f32 %v889, %v889
    %v1274 = vmul.f32 %v890, %v890
    %v1275 = vmul.f32 %v891, %v891
    %v1276 = vmul.f32 %v892, %v892
    %v1277 = vmul.f32 %v893, %v893
    %v1278 = vmul.f32 %v894, %v894
    %v1279 = vmul.f32 %v895, %v895
    %v1280 = vmul.f32 %v896, %v896
    %v1281 = vmul.f32 %v897, %v897
    %v1282 = vmul.f32 %v898, %v898
    %v1283 = vmul.f32 %v899, %v899
    %v1284 = vmul.f32 %v900, %v900
    %v1285 = vmul.f32 %v901, %v901
    %v1286 = vmul.f32 %v902, %v902
    %v1287 = vmul.f32 %v903, %v903
    %v1288 = vmul.f32 %v904, %v904
    %v1289 = vmul.f32 %v905, %v905
    %v1290 = vmul.f32 %v906, %v906
    %v1291 = vmul.f32 %v907, %v907
    %v1292 = vmul.f32 %v908, %v908
    %v1293 = vmul.f32 %v909, %v909
    %v1294 = vmul.f32 %v910, %v910
    %v1295 = vmul.f32 %v911, %v911
    %v1296 = vmul.f32 %v912, %v912
    %v1297 = vmul.f32 %v913, %v913
    %v1298 = vmul.f32 %v914, %v914
    %v1299 = vmul.f32 %v915, %v915
    %v1300 = vmul.f32 %v916, %v916
    %v1301 = vmul.f32 %v917, %v917
    %v1302 = vmul.f32 %v918, %v918
    %v1303 = vmul.f32 %v919, %v919
    %v1304 = vmul.f32 %v920, %v920
    %v1305 = vmul.f32 %v921, %v921
    %v1306 = vmul.f32 %v922, %v922
    %v1307 = vmul.f32 %v923, %v923
    %v1308 = vmul.f32 %v924, %v924
    %v1309 = vmul.f32 %v925, %v925
    %v1310 = vmul.f32 %v926, %v926
    %v1311 = vmul.f32 %v927, %v927
    %v1312 = vmul.f32 %v928, %v928
    %v1313 = vmul.f32 %v929, %v929
    %v1314 = vmul.f32 %v930, %v930
    %v1315 = vmul.f32 %v931, %v931
    %v1316 = vmul.f32 %v932, %v932
    %v1317 = vmul.f32 %v933, %v933
    %v1318 = vmul.f32 %v934, %v934
    %v1319 = vmul.f32 %v935, %v935
    %v1320 = vmul.f32 %v936, %v936
    %v1321 = vmul.f32 %v937, %v937
    %v1322 = vmul.f32 %v938, %v938
    %v1323 = vmul.f32 %v939, %v939
    %v1324 = vmul.f32 %v940, %v940
    %v1325 = vmul.f32 %v941, %v941
    %v1326 = vmul.f32 %v942, %v942
    %v1327 = vmul.f32 %v943, %v943
    %v1328 = vmul.f32 %v944, %v944
    %v1329 = vmul.f32 %v945, %v945
    %v1330 = vmul.f32 %v946, %v946
    %v1331 = vmul.f32 %v947, %v947
    %v1332 = vmul.f32 %v948, %v948
    %v1333 = vmul.f32 %v949, %v949
    %v1334 = vmul.f32 %v950, %v950
    %v1335 = vmul.f32 %v951, %v951
    %v1336 = vmul.f32 %v952, %v952
    %v1337 = vmul.f32 %v953, %v953
    %v1338 = vmul.f32 %v954, %v954
    %v1339 = vmul.f32 %v955, %v955
    %v1340 = vmul.f32 %v956, %v956
    %v1341 = vmul.f32 %v957, %v957
    %v1342 = vmul.f32 %v958, %v958
    %v1343 = vmul.f32 %v959, %v959
    %v1344 = vmul.f32 %v960, %v960
    %v1345 = vmul.f32 %v961, %v961
    %v1346 = vmul.f32 %v962, %v962
    %v1347 = vmul.f32 %v963, %v963
    %v1348 = vmul.f32 %v964, %v964
    %v1349 = vmul.f32 %v965, %v965
    %v1350 = vmul.f32 %v966, %v966
    %v1351 = vmul.f32 %v967, %v967
    %v1352 = vmul.f32 %v968, %v968
    %v1353 = vmul.f32 %v969, %v969
    %v1354 = vmul.f32 %v970, %v970
    %v1355 = vmul.f32 %v971, %v971
    %v1356 = vmul.f32 %v972, %v972
    %v1357 = vmul.f32 %v973, %v973
    %v1358 = vmul.f32 %v974, %v974
    %v1359 = vmul.f32 %v975, %v975
    %v1360 = vmul.f32 %v976, %v976
    %v1361 = vmul.f32 %v977, %v977
    %v1362 = vmul.f32 %v978, %v978
    %v1363 = vmul.f32 %v979, %v979
    %v1364 = vmul.f32 %v980, %v980
    %v1365 = vmul.f32 %v981, %v981
    %v1366 = vmul.f32 %v982, %v982
    %v1367 = vmul.f32 %v983, %v983
    %v1368 = vmul.f32 %v984, %v984
    %v1369 = vmul.f32 %v985, %v985
    %v1370 = vmul.f32 %v986, %v986
    %v1371 = vmul.f32 %v987, %v987
    %v1372 = vmul.f32 %v988, %v988
    %v1373 = vmul.f32 %v989, %v989
    %v1374 = vmul.f32 %v990, %v990
    %v1375 = vmul.f32 %v991, %v991
    %v1376 = vmul.f32 %v992, %v992
    %v1377 = vmul.f32 %v993, %v993
    %v1378 = vmul.f32 %v994, %v994
    %v1379 = vmul.f32 %v995, %v995
    %v1380 = vmul.f32 %v996, %v996
    %v1381 = vmul.f32 %v997, %v997
    %v1382 = vmul.f32 %v998, %v998
    %v1383 = vmul.f32 %v999, %v999
    %v1384 = vmul.f32 %v1000, %v1000
    %v1385 = vmul.f32 %v1001, %v1001
    %v1386 = vmul.f32 %v1002, %v1002
    %v1387 = vmul.f32 %v1003, %v1003
    %v1388 = vmul.f32 %v1004, %v1004
    %v1389 = vmul.f32 %v1005, %v1005
    %v1390 = vmul.f32 %v1006, %v1006
    %v1391 = vmul.f32 %v1007, %v1007
    %v1392 = vmul.f32 %v1008, %v1008
    %v1393 = vmul.f32 %v1009, %v1009
    %v1394 = vmul.f32 %v1010, %v1010
    %v1395 = vmul.f32 %v1011, %v1011
    %v1396 = vmul.f32 %v1012, %v1012
    %v1397 = vmul.f32 %v1013, %v1013
    %v1398 = vmul.f32 %v1014, %v1014
    %v1399 = vmul.f32 %v1015, %v1015
    %v1400 = vmul.f32 %v1016, %v1016
    %v1401 = vmul.f32 %v1017, %v1017
    %v1402 = vmul.f32 %v1018, %v1018
    %v1403 = vmul.f32 %v1019, %v1019
    %v1404 = vmul.f32 %v1020, %v1020
    %v1405 = vmul.f32 %v1021, %v1021
    %v1406 = vmul.f32 %v1022, %v1022
    %v1407 = vmul.f32 %v1023, %v1023
    %v1408 = vmul.f32 %v1024, %v1024
    %v1409 = vmul.f32 %v1025, %v1025
    %v1410 = vmul.f32 %v1026, %v1026
    %v1411 = vmul.f32 %v1027, %v1027
    %v1412 = vmul.f32 %v1028, %v1028
    %v1413 = vmul.f32 %v1029, %v1029
    %v1414 = vmul.f32 %v1030, %v1030
    %v1415 = vmul.f32 %v1031, %v1031
    %v1416 = vmul.f32 %v1032, %v1032
    %v1417 = vmul.f32 %v1033, %v1033
    %v1418 = vmul.f32 %v1034, %v1034
    %v1419 = vmul.f32 %v1035, %v1035
    %v1420 = vmul.f32 %v1036, %v1036
    %v1421 = vmul.f32 %v1037, %v1037
    %v1422 = vmul.f32 %v1038, %v1038
    %v1423 = vmul.f32 %v1039, %v1039
    %v1424 = vmul.f32 %v1040, %v1040
    %v1425 = vmul.f32 %v1041, %v1041
    %v1426 = vmul.f32 %v1042, %v1042
    %v1427 = vmul.f32 %v1043, %v1043
    %v1428 = vmul.f32 %v1044, %v1044
    %v1429 = vmul.f32 %v1045, %v1045
    %v1430 = vmul.f32 %v1046, %v1046
    %v1431 = vmul.f32 %v1047, %v1047
    %v1432 = vmul.f32 %v1048, %v1048
    %v1433 = vmul.f32 %v1049, %v1049
    %v1434 = vmul.f32 %v1050, %v1050
    %v1435 = vmul.f32 %v1051, %v1051
    %v1436 = vmul.f32 %v1052, %v1052
    %v1437 = vmul.f32 %v1053, %v1053
    %v1438 = vmul.f32 %v1054, %v1054
    %v1439 = vmul.f32 %v1055, %v1055
    %v1440 = vmul.f32 %v1056, %v1056
    %v1441 = vmul.f32 %v1057, %v1057
    %v1442 = vmul.f32 %v1058, %v1058
    %v1443 = vmul.f32 %v1059, %v1059
    %v1444 = vmul.f32 %v1060, %v1060
    %v1445 = vmul.f32 %v1061, %v1061
    %v1446 = vmul.f32 %v1062, %v1062
    %v1447 = vmul.f32 %v1063, %v1063
    %v1448 = vmul.f32 %v1064, %v1064
    %v1449 = vmul.f32 %v1065, %v1065
    %v1450 = vmul.f32 %v1066, %v1066
    %v1451 = vmul.f32 %v1067, %v1067
    %v1452 = vmul.f32 %v1068, %v1068
    %v1453 = vmul.f32 %v1069, %v1069
    %v1454 = vmul.f32 %v1070, %v1070
    %v1455 = vmul.f32 %v1071, %v1071
    %v1456 = vmul.f32 %v1072, %v1072
    %v1457 = vmul.f32 %v1073, %v1073
    %v1458 = vmul.f32 %v1074, %v1074
    %v1459 = vmul.f32 %v1075, %v1075
    %v1460 = vmul.f32 %v1076, %v1076
    %v1461 = vmul.f32 %v1077, %v1077
    %v1462 = vmul.f32 %v1078, %v1078
    %v1463 = vmul.f32 %v1079, %v1079
    %v1464 = vmul.f32 %v1080, %v1080
    %v1465 = vmul.f32 %v1081, %v1081
    %v1466 = vmul.f32 %v1082, %v1082
    %v1467 = vmul.f32 %v1083, %v1083
    %v1468 = vmul.f32 %v1084, %v1084
    %v1469 = vmul.f32 %v1085, %v1085
    %v1470 = vmul.f32 %v1086, %v1086
    %v1471 = vmul.f32 %v1087, %v1087
    %v1472 = vmul.f32 %v1088, %v1088
    %v1473 = vmul.f32 %v1089, %v1089
    %v1474 = vmul.f32 %v1090, %v1090
    %v1475 = vmul.f32 %v1091, %v1091
    %v1476 = vmul.f32 %v1092, %v1092
    %v1477 = vmul.f32 %v1093, %v1093
    %v1478 = vmul.f32 %v1094, %v1094
    %v1479 = vmul.f32 %v1095, %v1095
    %v1480 = vmul.f32 %v1096, %v1096
    %v1481 = vmul.f32 %v1097, %v1097
    %v1482 = vmul.f32 %v1098, %v1098
    %v1483 = vmul.f32 %v1099, %v1099
    %v1484 = vmul.f32 %v1100, %v1100
    %v1485 = vmul.f32 %v1101, %v1101
    %v1486 = vmul.f32 %v1102, %v1102
    %v1487 = vmul.f32 %v1103, %v1103
    %v1488 = vmul.f32 %v1104, %v1104
    %v1489 = vmul.f32 %v1105, %v1105
    %v1490 = vmul.f32 %v1106, %v1106
    %v1491 = vmul.f32 %v1107, %v1107
    %v1492 = vmul.f32 %v1108, %v1108
    %v1493 = vmul.f32 %v1109, %v1109
    %v1494 = vmul.f32 %v1110, %v1110
    %v1495 = vmul.f32 %v1111, %v1111
    %v1496 = vmul.f32 %v1112, %v1112
    %v1497 = vmul.f32 %v1113, %v1113
    %v1498 = vmul.f32 %v1114, %v1114
    %v1499 = vmul.f32 %v1115, %v1115
    %v1500 = vmul.f32 %v1116, %v1116
    %v1501 = vmul.f32 %v1117, %v1117
    %v1502 = vmul.f32 %v1118, %v1118
    %v1503 = vmul.f32 %v1119, %v1119
    %v1504 = vmul.f32 %v1120, %v1120
    %v1505 = vmul.f32 %v1121, %v1121
    %v1506 = vmul.f32 %v1122, %v1122
    %v1507 = vmul.f32 %v1123, %v1123
    %v1508 = vmul.f32 %v1124, %v1124
    %v1509 = vmul.f32 %v1125, %v1125
    %v1510 = vmul.f32 %v1126, %v1126
    %v1511 = vmul.f32 %v1127, %v1127
    %v1512 = vmul.f32 %v1128, %v1128
    %v1513 = vmul.f32 %v1129, %v1129
    %v1514 = vmul.f32 %v1130, %v1130
    %v1515 = vmul.f32 %v1131, %v1131
    %v1516 = vmul.f32 %v1132, %v1132
    %v1517 = vmul.f32 %v1133, %v1133
    %v1518 = vmul.f32 %v1134, %v1134
    %v1519 = vmul.f32 %v1135, %v1135
    %v1520 = vmul.f32 %v1136, %v1136
    %v1521 = vmul.f32 %v1137, %v1137
    %v1522 = vmul.f32 %v1138, %v1138
    %v1523 = vmul.f32 %v1139, %v1139
    %v1524 = vmul.f32 %v1140, %v1140
    %v1525 = vmul.f32 %v1141, %v1141
    %v1526 = vmul.f32 %v1142, %v1142
    %v1527 = vmul.f32 %v1143, %v1143
    %v1528 = vmul.f32 %v1144, %v1144
    %v1529 = vmul.f32 %v1145, %v1145
    %v1530 = vmul.f32 %v1146, %v1146
    %v1531 = vmul.f32 %v1147, %v1147
    %v1532 = vmul.f32 %v1148, %v1148
    %v1533 = vmul.f32 %v1149, %v1149
    %v1534 = vmul.f32 %v1150, %v1150
    %v1535 = vmul.f32 %v1151, %v1151
    %v1536 = vmul.f32 %v1152, %v1152
    %v1537 = vmul.f32 %v1153, %v1153
    %v1538 = vmul.f32 %v1154, %v1154
    %v1539 = vmul.f32 %v1155, %v1155
    %v1540 = vmul.f32 %v1156, %v1156
    %v1541 = vmul.f32 %v1157, %v1157
    %v1542 = vmul.f32 %v1158, %v1158
    %v1543 = vmul.f32 %v1159, %v1159
    %v1544 = vmul.f32 %v1160, %v1160
    %v1545 = vmul.f32 %v1161, %v1161
    %v1546 = vmul.f32 %v1162, %v1162
    %v1547 = vmul.f32 %v1163, %v1163
    %v1548 = vmul.f32 %v1164, %v1164
    %v1549 = vmul.f32 %v1165, %v1165
    %v1550 = vmul.f32 %v1166, %v1166
    %v1551 = vmul.f32 %v1167, %v1167
    %v1552 = vmul.f32 %v1168, %v1168
    %v1553 = vmul.f32 %v1169, %v1169
    %v1554 = vmul.f32 %v1170, %v1170
    %v1555 = vmul.f32 %v1171, %v1171
    %v1556 = vmul.f32 %v1172, %v1172
    %v1557 = vmul.f32 %v1173, %v1173
    %v1558 = vmul.f32 %v1174, %v1174
    %v1559 = vmul.f32 %v1175, %v1175
    %v1560 = vmul.f32 %v1176, %v1176
    %v1561 = vmul.f32 %v1177, %v1177
    %v1562 = vmul.f32 %v1178, %v1178
    %v1563 = vmul.f32 %v1179, %v1179
    %v1564 = vmul.f32 %v1180, %v1180
    %v1565 = vmul.f32 %v1181, %v1181
    %v1566 = vmul.f32 %v1182, %v1182
    %v1567 = vmul.f32 %v1183, %v1183
    %v1568 = vmul.f32 %v1184, %v1184
    %v1569 = vmul.f32 %v1185, %v1185
    %v1570 = vmul.f32 %v1186, %v1186
    %v1571 = vmul.f32 %v1187, %v1187
    %v1572 = vmul.f32 %v1188, %v1188
    %v1573 = vmul.f32 %v1189, %v1189
    %v1574 = vmul.f32 %v1190, %v1190
    %v1575 = vmul.f32 %v1191, %v1191
    %v1576 = vmul.f32 %v1192, %v1192
    %v1577 = vmul.f32 %v1193, %v1193
    %v1578 = vmul.f32 %v1194, %v1194
    %v1579 = vmul.f32 %v1195, %v1195
    %v1580 = vmul.f32 %v1196, %v1196
    %v1581 = vmul.f32 %v1197, %v1197
    %v1582 = vmul.f32 %v1198, %v1198
    %v1583 = vmul.f32 %v1199, %v1199
    %v1584 = vmul.f32 %v1200, %v1200
    %v1585 = vmul.f32 %v1201, %v1201
    %v1586 = vmul.f32 %v1202, %v1202
    %v1587 = vmul.f32 %v1203, %v1203
    %v1588 = vmul.f32 %v1204, %v1204
    %v1589 = vmul.f32 %v1205, %v1205
    %v1590 = vmul.f32 %v1206, %v1206
    %v1591 = vmul.f32 %v1207, %v1207
    %v1592 = vmul.f32 %v1208, %v1208
    %v1593 = vld [vmem:[#allocation7] sm:$0xff]
    %v1594 = vadd.f32 %v1209, %v1210
    %v1595 = vadd.f32 %v1594, %v1211
    %v1596 = vadd.f32 %v1595, %v1212
    %v1597 = vadd.f32 %v1596, %v1213
    %v1598 = vadd.f32 %v1597, %v1214
    %v1599 = vadd.f32 %v1598, %v1215
    %v1600 = vadd.f32 %v1599, %v1216
    %v1601 = vadd.f32 %v1600, %v1217
    %v1602 = vadd.f32 %v1601, %v1218
    %v1603 = vadd.f32 %v1602, %v1219
    %v1604 = vadd.f32 %v1603, %v1220
    %v1605 = vadd.f32 %v1604, %v1221
    %v1606 = vadd.f32 %v1605, %v1222
    %v1607 = vadd.f32 %v1606, %v1223
    %v1608 = vadd.f32 %v1607, %v1224
    %v1609 = vadd.f32 %v1608, %v1225
    %v1610 = vadd.f32 %v1609, %v1226
    %v1611 = vadd.f32 %v1610, %v1227
    %v1612 = vadd.f32 %v1611, %v1228
    %v1613 = vadd.f32 %v1612, %v1229
    %v1614 = vadd.f32 %v1613, %v1230
    %v1615 = vadd.f32 %v1614, %v1231
    %v1616 = vadd.f32 %v1615, %v1232
    %v1617 = vadd.f32 %v1616, %v1233
    %v1618 = vadd.f32 %v1617, %v1234
    %v1619 = vadd.f32 %v1618, %v1235
    %v1620 = vadd.f32 %v1619, %v1236
    %v1621 = vadd.f32 %v1620, %v1237
    %v1622 = vadd.f32 %v1621, %v1238
    %v1623 = vadd.f32 %v1622, %v1239
    %v1624 = vadd.f32 %v1623, %v1240
    %v1625 = vadd.f32 %v1624, %v1241
    %v1626 = vadd.f32 %v1625, %v1242
    %v1627 = vadd.f32 %v1626, %v1243
    %v1628 = vadd.f32 %v1627, %v1244
    %v1629 = vadd.f32 %v1628, %v1245
    %v1630 = vadd.f32 %v1629, %v1246
    %v1631 = vadd.f32 %v1630, %v1247
    %v1632 = vadd.f32 %v1631, %v1248
    %v1633 = vadd.f32 %v1632, %v1249
    %v1634 = vadd.f32 %v1633, %v1250
    %v1635 = vadd.f32 %v1634, %v1251
    %v1636 = vadd.f32 %v1635, %v1252
    %v1637 = vadd.f32 %v1636, %v1253
    %v1638 = vadd.f32 %v1637, %v1254
    %v1639 = vadd.f32 %v1638, %v1255
    %v1640 = vadd.f32 %v1639, %v1256
    %v1641 = vadd.f32 %v1640, %v1257
    %v1642 = vadd.f32 %v1641, %v1258
    %v1643 = vadd.f32 %v1642, %v1259
    %v1644 = vadd.f32 %v1643, %v1260
    %v1645 = vadd.f32 %v1644, %v1261
    %v1646 = vadd.f32 %v1645, %v1262
    %v1647 = vadd.f32 %v1646, %v1263
    %v1648 = vadd.f32 %v1647, %v1264
    %v1649 = vadd.f32 %v1648, %v1265
    %v1650 = vadd.f32 %v1649, %v1266
    %v1651 = vadd.f32 %v1650, %v1267
    %v1652 = vadd.f32 %v1651, %v1268
    %v1653 = vadd.f32 %v1652, %v1269
    %v1654 = vadd.f32 %v1653, %v1270
    %v1655 = vadd.f32 %v1654, %v1271
    %v1656 = vadd.f32 %v1655, %v1272
    %v1657 = vadd.f32 %v1656, %v1273
    %v1658 = vadd.f32 %v1657, %v1274
    %v1659 = vadd.f32 %v1658, %v1275
    %v1660 = vadd.f32 %v1659, %v1276
    %v1661 = vadd.f32 %v1660, %v1277
    %v1662 = vadd.f32 %v1661, %v1278
    %v1663 = vadd.f32 %v1662, %v1279
    %v1664 = vadd.f32 %v1663, %v1280
    %v1665 = vadd.f32 %v1664, %v1281
    %v1666 = vadd.f32 %v1665, %v1282
    %v1667 = vadd.f32 %v1666, %v1283
    %v1668 = vadd.f32 %v1667, %v1284
    %v1669 = vadd.f32 %v1668, %v1285
    %v1670 = vadd.f32 %v1669, %v1286
    %v1671 = vadd.f32 %v1670, %v1287
    %v1672 = vadd.f32 %v1671, %v1288
    %v1673 = vadd.f32 %v1672, %v1289
    %v1674 = vadd.f32 %v1673, %v1290
    %v1675 = vadd.f32 %v1674, %v1291
    %v1676 = vadd.f32 %v1675, %v1292
    %v1677 = vadd.f32 %v1676, %v1293
    %v1678 = vadd.f32 %v1677, %v1294
    %v1679 = vadd.f32 %v1678, %v1295
    %v1680 = vadd.f32 %v1679, %v1296
    %v1681 = vadd.f32 %v1680, %v1297
    %v1682 = vadd.f32 %v1681, %v1298
    %v1683 = vadd.f32 %v1682, %v1299
    %v1684 = vadd.f32 %v1683, %v1300
    %v1685 = vadd.f32 %v1684, %v1301
    %v1686 = vadd.f32 %v1685, %v1302
    %v1687 = vadd.f32 %v1686, %v1303
    %v1688 = vadd.f32 %v1687, %v1304
    %v1689 = vadd.f32 %v1688, %v1305
    %v1690 = vadd.f32 %v1689, %v1306
    %v1691 = vadd.f32 %v1690, %v1307
    %v1692 = vadd.f32 %v1691, %v1308
    %v1693 = vadd.f32 %v1692, %v1309
    %v1694 = vadd.f32 %v1693, %v1310
    %v1695 = vadd.f32 %v1694, %v1311
    %v1696 = vadd.f32 %v1695, %v1312
    %v1697 = vadd.f32 %v1696, %v1313
    %v1698 = vadd.f32 %v1697, %v1314
    %v1699 = vadd.f32 %v1698, %v1315
    %v1700 = vadd.f32 %v1699, %v1316
    %v1701 = vadd.f32 %v1700, %v1317
    %v1702 = vadd.f32 %v1701, %v1318
    %v1703 = vadd.f32 %v1702, %v1319
    %v1704 = vadd.f32 %v1703, %v1320
    %v1705 = vadd.f32 %v1704, %v1321
    %v1706 = vadd.f32 %v1705, %v1322
    %v1707 = vadd.f32 %v1706, %v1323
    %v1708 = vadd.f32 %v1707, %v1324
    %v1709 = vadd.f32 %v1708, %v1325
    %v1710 = vadd.f32 %v1709, %v1326
    %v1711 = vadd.f32 %v1710, %v1327
    %v1712 = vadd.f32 %v1711, %v1328
    %v1713 = vadd.f32 %v1712, %v1329
    %v1714 = vadd.f32 %v1713, %v1330
    %v1715 = vadd.f32 %v1714, %v1331
    %v1716 = vadd.f32 %v1715, %v1332
    %v1717 = vadd.f32 %v1716, %v1333
    %v1718 = vadd.f32 %v1717, %v1334
    %v1719 = vadd.f32 %v1718, %v1335
    %v1720 = vadd.f32 %v1719, %v1336
    %v1721 = vadd.f32 %v1720, %v1337
    %v1722 = vadd.f32 %v1721, %v1338
    %v1723 = vadd.f32 %v1722, %v1339
    %v1724 = vadd.f32 %v1723, %v1340
    %v1725 = vadd.f32 %v1724, %v1341
    %v1726 = vadd.f32 %v1725, %v1342
    %v1727 = vadd.f32 %v1726, %v1343
    %v1728 = vadd.f32 %v1727, %v1344
    %v1729 = vadd.f32 %v1728, %v1345
    %v1730 = vadd.f32 %v1729, %v1346
    %v1731 = vadd.f32 %v1730, %v1347
    %v1732 = vadd.f32 %v1731, %v1348
    %v1733 = vadd.f32 %v1732, %v1349
    %v1734 = vadd.f32 %v1733, %v1350
    %v1735 = vadd.f32 %v1734, %v1351
    %v1736 = vadd.f32 %v1735, %v1352
    %v1737 = vadd.f32 %v1736, %v1353
    %v1738 = vadd.f32 %v1737, %v1354
    %v1739 = vadd.f32 %v1738, %v1355
    %v1740 = vadd.f32 %v1739, %v1356
    %v1741 = vadd.f32 %v1740, %v1357
    %v1742 = vadd.f32 %v1741, %v1358
    %v1743 = vadd.f32 %v1742, %v1359
    %v1744 = vadd.f32 %v1743, %v1360
    %v1745 = vadd.f32 %v1744, %v1361
    %v1746 = vadd.f32 %v1745, %v1362
    %v1747 = vadd.f32 %v1746, %v1363
    %v1748 = vadd.f32 %v1747, %v1364
    %v1749 = vadd.f32 %v1748, %v1365
    %v1750 = vadd.f32 %v1749, %v1366
    %v1751 = vadd.f32 %v1750, %v1367
    %v1752 = vadd.f32 %v1751, %v1368
    %v1753 = vadd.f32 %v1752, %v1369
    %v1754 = vadd.f32 %v1753, %v1370
    %v1755 = vadd.f32 %v1754, %v1371
    %v1756 = vadd.f32 %v1755, %v1372
    %v1757 = vadd.f32 %v1756, %v1373
    %v1758 = vadd.f32 %v1757, %v1374
    %v1759 = vadd.f32 %v1758, %v1375
    %v1760 = vadd.f32 %v1759, %v1376
    %v1761 = vadd.f32 %v1760, %v1377
    %v1762 = vadd.f32 %v1761, %v1378
    %v1763 = vadd.f32 %v1762, %v1379
    %v1764 = vadd.f32 %v1763, %v1380
    %v1765 = vadd.f32 %v1764, %v1381
    %v1766 = vadd.f32 %v1765, %v1382
    %v1767 = vadd.f32 %v1766, %v1383
    %v1768 = vadd.f32 %v1767, %v1384
    %v1769 = vadd.f32 %v1768, %v1385
    %v1770 = vadd.f32 %v1769, %v1386
    %v1771 = vadd.f32 %v1770, %v1387
    %v1772 = vadd.f32 %v1771, %v1388
    %v1773 = vadd.f32 %v1772, %v1389
    %v1774 = vadd.f32 %v1773, %v1390
    %v1775 = vadd.f32 %v1774, %v1391
    %v1776 = vadd.f32 %v1775, %v1392
    %v1777 = vadd.f32 %v1776, %v1393
    %v1778 = vadd.f32 %v1777, %v1394
    %v1779 = vadd.f32 %v1778, %v1395
    %v1780 = vadd.f32 %v1779, %v1396
    %v1781 = vadd.f32 %v1780, %v1397
    %v1782 = vadd.f32 %v1781, %v1398
    %v1783 = vadd.f32 %v1782, %v1399
    %v1784 = vadd.f32 %v1783, %v1400
    %v1785 = vadd.f32 %v1784, %v1401
    %v1786 = vadd.f32 %v1785, %v1402
    %v1787 = vadd.f32 %v1786, %v1403
    %v1788 = vadd.f32 %v1787, %v1404
    %v1789 = vadd.f32 %v1788, %v1405
    %v1790 = vadd.f32 %v1789, %v1406
    %v1791 = vadd.f32 %v1790, %v1407
    %v1792 = vadd.f32 %v1791, %v1408
    %v1793 = vadd.f32 %v1792, %v1409
    %v1794 = vadd.f32 %v1793, %v1410
    %v1795 = vadd.f32 %v1794, %v1411
    %v1796 = vadd.f32 %v1795, %v1412
    %v1797 = vadd.f32 %v1796, %v1413
    %v1798 = vadd.f32 %v1797, %v1414
    %v1799 = vadd.f32 %v1798, %v1415
    %v1800 = vadd.f32 %v1799, %v1416
    %v1801 = vadd.f32 %v1800, %v1417
    %v1802 = vadd.f32 %v1801, %v1418
    %v1803 = vadd.f32 %v1802, %v1419
    %v1804 = vadd.f32 %v1803, %v1420
    %v1805 = vadd.f32 %v1804, %v1421
    %v1806 = vadd.f32 %v1805, %v1422
    %v1807 = vadd.f32 %v1806, %v1423
    %v1808 = vadd.f32 %v1807, %v1424
    %v1809 = vadd.f32 %v1808, %v1425
    %v1810 = vadd.f32 %v1809, %v1426
    %v1811 = vadd.f32 %v1810, %v1427
    %v1812 = vadd.f32 %v1811, %v1428
    %v1813 = vadd.f32 %v1812, %v1429
    %v1814 = vadd.f32 %v1813, %v1430
    %v1815 = vadd.f32 %v1814, %v1431
    %v1816 = vadd.f32 %v1815, %v1432
    %v1817 = vadd.f32 %v1816, %v1433
    %v1818 = vadd.f32 %v1817, %v1434
    %v1819 = vadd.f32 %v1818, %v1435
    %v1820 = vadd.f32 %v1819, %v1436
    %v1821 = vadd.f32 %v1820, %v1437
    %v1822 = vadd.f32 %v1821, %v1438
    %v1823 = vadd.f32 %v1822, %v1439
    %v1824 = vadd.f32 %v1823, %v1440
    %v1825 = vadd.f32 %v1824, %v1441
    %v1826 = vadd.f32 %v1825, %v1442
    %v1827 = vadd.f32 %v1826, %v1443
    %v1828 = vadd.f32 %v1827, %v1444
    %v1829 = vadd.f32 %v1828, %v1445
    %v1830 = vadd.f32 %v1829, %v1446
    %v1831 = vadd.f32 %v1830, %v1447
    %v1832 = vadd.f32 %v1831, %v1448
    %v1833 = vadd.f32 %v1832, %v1449
    %v1834 = vadd.f32 %v1833, %v1450
    %v1835 = vadd.f32 %v1834, %v1451
    %v1836 = vadd.f32 %v1835, %v1452
    %v1837 = vadd.f32 %v1836, %v1453
    %v1838 = vadd.f32 %v1837, %v1454
    %v1839 = vadd.f32 %v1838, %v1455
    %v1840 = vadd.f32 %v1839, %v1456
    %v1841 = vadd.f32 %v1840, %v1457
    %v1842 = vadd.f32 %v1841, %v1458
    %v1843 = vadd.f32 %v1842, %v1459
    %v1844 = vadd.f32 %v1843, %v1460
    %v1845 = vadd.f32 %v1844, %v1461
    %v1846 = vadd.f32 %v1845, %v1462
    %v1847 = vadd.f32 %v1846, %v1463
    %v1848 = vadd.f32 %v1847, %v1464
    %v1849 = vadd.f32 %v1848, %v1465
    %v1850 = vadd.f32 %v1849, %v1466
    %v1851 = vadd.f32 %v1850, %v1467
    %v1852 = vadd.f32 %v1851, %v1468
    %v1853 = vadd.f32 %v1852, %v1469
    %v1854 = vadd.f32 %v1853, %v1470
    %v1855 = vadd.f32 %v1854, %v1471
    %v1856 = vadd.f32 %v1855, %v1472
    %v1857 = vadd.f32 %v1856, %v1473
    %v1858 = vadd.f32 %v1857, %v1474
    %v1859 = vadd.f32 %v1858, %v1475
    %v1860 = vadd.f32 %v1859, %v1476
    %v1861 = vadd.f32 %v1860, %v1477
    %v1862 = vadd.f32 %v1861, %v1478
    %v1863 = vadd.f32 %v1862, %v1479
    %v1864 = vadd.f32 %v1863, %v1480
    %v1865 = vadd.f32 %v1864, %v1481
    %v1866 = vadd.f32 %v1865, %v1482
    %v1867 = vadd.f32 %v1866, %v1483
    %v1868 = vadd.f32 %v1867, %v1484
    %v1869 = vadd.f32 %v1868, %v1485
    %v1870 = vadd.f32 %v1869, %v1486
    %v1871 = vadd.f32 %v1870, %v1487
    %v1872 = vadd.f32 %v1871, %v1488
    %v1873 = vadd.f32 %v1872, %v1489
    %v1874 = vadd.f32 %v1873, %v1490
    %v1875 = vadd.f32 %v1874, %v1491
    %v1876 = vadd.f32 %v1875, %v1492
    %v1877 = vadd.f32 %v1876, %v1493
    %v1878 = vadd.f32 %v1877, %v1494
    %v1879 = vadd.f32 %v1878, %v1495
    %v1880 = vadd.f32 %v1879, %v1496
    %v1881 = vadd.f32 %v1880, %v1497
    %v1882 = vadd.f32 %v1881, %v1498
    %v1883 = vadd.f32 %v1882, %v1499
    %v1884 = vadd.f32 %v1883, %v1500
    %v1885 = vadd.f32 %v1884, %v1501
    %v1886 = vadd.f32 %v1885, %v1502
    %v1887 = vadd.f32 %v1886, %v1503
    %v1888 = vadd.f32 %v1887, %v1504
    %v1889 = vadd.f32 %v1888, %v1505
    %v1890 = vadd.f32 %v1889, %v1506
    %v1891 = vadd.f32 %v1890, %v1507
    %v1892 = vadd.f32 %v1891, %v1508
    %v1893 = vadd.f32 %v1892, %v1509
    %v1894 = vadd.f32 %v1893, %v1510
    %v1895 = vadd.f32 %v1894, %v1511
    %v1896 = vadd.f32 %v1895, %v1512
    %v1897 = vadd.f32 %v1896, %v1513
    %v1898 = vadd.f32 %v1897, %v1514
    %v1899 = vadd.f32 %v1898, %v1515
    %v1900 = vadd.f32 %v1899, %v1516
    %v1901 = vadd.f32 %v1900, %v1517
    %v1902 = vadd.f32 %v1901, %v1518
    %v1903 = vadd.f32 %v1902, %v1519
    %v1904 = vadd.f32 %v1903, %v1520
    %v1905 = vadd.f32 %v1904, %v1521
    %v1906 = vadd.f32 %v1905, %v1522
    %v1907 = vadd.f32 %v1906, %v1523
    %v1908 = vadd.f32 %v1907, %v1524
    %v1909 = vadd.f32 %v1908, %v1525
    %v1910 = vadd.f32 %v1909, %v1526
    %v1911 = vadd.f32 %v1910, %v1527
    %v1912 = vadd.f32 %v1911, %v1528
    %v1913 = vadd.f32 %v1912, %v1529
    %v1914 = vadd.f32 %v1913, %v1530
    %v1915 = vadd.f32 %v1914, %v1531
    %v1916 = vadd.f32 %v1915, %v1532
    %v1917 = vadd.f32 %v1916, %v1533
    %v1918 = vadd.f32 %v1917, %v1534
    %v1919 = vadd.f32 %v1918, %v1535
    %v1920 = vadd.f32 %v1919, %v1536
    %v1921 = vadd.f32 %v1920, %v1537
    %v1922 = vadd.f32 %v1921, %v1538
    %v1923 = vadd.f32 %v1922, %v1539
    %v1924 = vadd.f32 %v1923, %v1540
    %v1925 = vadd.f32 %v1924, %v1541
    %v1926 = vadd.f32 %v1925, %v1542
    %v1927 = vadd.f32 %v1926, %v1543
    %v1928 = vadd.f32 %v1927, %v1544
    %v1929 = vadd.f32 %v1928, %v1545
    %v1930 = vadd.f32 %v1929, %v1546
    %v1931 = vadd.f32 %v1930, %v1547
    %v1932 = vadd.f32 %v1931, %v1548
    %v1933 = vadd.f32 %v1932, %v1549
    %v1934 = vadd.f32 %v1933, %v1550
    %v1935 = vadd.f32 %v1934, %v1551
    %v1936 = vadd.f32 %v1935, %v1552
    %v1937 = vadd.f32 %v1936, %v1553
    %v1938 = vadd.f32 %v1937, %v1554
    %v1939 = vadd.f32 %v1938, %v1555
    %v1940 = vadd.f32 %v1939, %v1556
    %v1941 = vadd.f32 %v1940, %v1557
    %v1942 = vadd.f32 %v1941, %v1558
    %v1943 = vadd.f32 %v1942, %v1559
    %v1944 = vadd.f32 %v1943, %v1560
    %v1945 = vadd.f32 %v1944, %v1561
    %v1946 = vadd.f32 %v1945, %v1562
    %v1947 = vadd.f32 %v1946, %v1563
    %v1948 = vadd.f32 %v1947, %v1564
    %v1949 = vadd.f32 %v1948, %v1565
    %v1950 = vadd.f32 %v1949, %v1566
    %v1951 = vadd.f32 %v1950, %v1567
    %v1952 = vadd.f32 %v1951, %v1568
    %v1953 = vadd.f32 %v1952, %v1569
    %v1954 = vadd.f32 %v1953, %v1570
    %v1955 = vadd.f32 %v1954, %v1571
    %v1956 = vadd.f32 %v1955, %v1572
    %v1957 = vadd.f32 %v1956, %v1573
    %v1958 = vadd.f32 %v1957, %v1574
    %v1959 = vadd.f32 %v1958, %v1575
    %v1960 = vadd.f32 %v1959, %v1576
    %v1961 = vadd.f32 %v1960, %v1577
    %v1962 = vadd.f32 %v1961, %v1578
    %v1963 = vadd.f32 %v1962, %v1579
    %v1964 = vadd.f32 %v1963, %v1580
    %v1965 = vadd.f32 %v1964, %v1581
    %v1966 = vadd.f32 %v1965, %v1582
    %v1967 = vadd.f32 %v1966, %v1583
    %v1968 = vadd.f32 %v1967, %v1584
    %v1969 = vadd.f32 %v1968, %v1585
    %v1970 = vadd.f32 %v1969, %v1586
    %v1971 = vadd.f32 %v1970, %v1587
    %v1972 = vadd.f32 %v1971, %v1588
    %v1973 = vadd.f32 %v1972, %v1589
    %v1974 = vadd.f32 %v1973, %v1590
    %v1975 = vadd.f32 %v1974, %v1591
    %v1976 = vadd.f32 %v1975, %v1592
    %v1977 = vadd.f32 %v1593, %v1976
    %1978 = vst [vmem:[#allocation7] sm:$0xff] %v1977
    // Predicated region
    $region22: #{tpu_custom_call.1} parent=1 // pred_check
      _
    $region23: #{tpu_custom_call.1} parent=1 // pred_check_branch
      %1980 = sbr.rel (0) target = $region25
    $region24: #{tpu_custom_call.1} parent=1 // pred_region
      %s1982 = ssub.s32 128, 128
      %1983 = vsyncadd [#allocation4], %s1982
      %s1985 = sshll.u32 [#allocation7], 4
      %s1986 = int_to_ptr.vmem [resolvable:$true] %s1985
      %1988 = dma.vmem_to_hbm [thread:$0]  %s1986, 128, %s2, [#allocation4]
    $region25: #{tpu_custom_call.1} parent=1 // pred_fallthru
      _
    // Predicated region
    $region26: #{tpu_custom_call.1} parent=1 // pred_check
      _
    $region27: #{tpu_custom_call.1} parent=1 // pred_check_branch
      %1990 = sbr.rel (0) target = $region29
    $region28: #{tpu_custom_call.1} parent=1 // pred_region
      %1991 = dma.done [#allocation4], 128
    $region29: #{tpu_custom_call.1} parent=1 // pred_fallthru
      _
    %1992 = vsyncpa [#allocation3], 1
    %1993 = vsyncpa [#allocation6], 1
    %1994 = vsyncpa [#allocation4], 1

</llo_original>
